<compile_context>
chip_gen: v7x
topology: tpu7x:2x2x1
jax: 0.10.0
libtpu: 0.0.40
codegen_flags: <defaults>
</compile_context>

<pallas_src>
import math

import jax
import jax.numpy as jnp
import numpy as np
from jax.experimental import pallas as pl
from jax.experimental.pallas import tpu as pltpu

LN_EPS = 1e-5
# Above default scoped VMEM (16 MiB v5e / 32 MiB v6e,v7x), below v7x physical (64 MiB).
VMEM_LIMIT_BYTES = 48 * 1024 * 1024


def _const_spec(shape):
    """Constant (grid-invariant) block: DMA'd once, single-buffered in VMEM."""
    ndim = len(shape)
    return pl.BlockSpec(shape, lambda i: (0,) * ndim, pipeline_mode=pl.Buffered(1))


# ---------------------------------------------------------------------------
# Kernel 1: fused MHA + residual + LayerNorm over a tile of TB batch elements
# ---------------------------------------------------------------------------
def _attn_ln_kernel(n_heads: int, eps: float, self_attn: bool):
    def kernel(*refs):
        if self_attn:
            (q_ref, wq_ref, wk_ref, wv_ref, wo_ref,
             bq_ref, bk_ref, bv_ref, bo_ref, g_ref, beta_ref, o_ref) = refs
            kv_ref = q_ref
        else:
            (q_ref, kv_ref, wq_ref, wk_ref, wv_ref, wo_ref,
             bq_ref, bk_ref, bv_ref, bo_ref, g_ref, beta_ref, o_ref) = refs

        tb, lq, d_model = q_ref.shape
        lk = kv_ref.shape[1]
        dh = d_model // n_heads

        q_in = q_ref[...]                               # (tb, lq, D) f32
        qf = q_in.reshape(tb * lq, d_model)             # residual base, f32
        qb = qf.astype(jnp.bfloat16)
        if self_attn:
            kvb = qb
        else:
            kvb = kv_ref[...].reshape(tb * lk, d_model).astype(jnp.bfloat16)

        # Fused lane-dense projections: bf16 MXU inputs, f32 accumulation.
        # (1/sqrt(dh) softmax scale is pre-folded into wq / bq by the wrapper.)
        q_p = jnp.dot(qb, wq_ref[...], preferred_element_type=jnp.float32) + bq_ref[...]
        k_p = jnp.dot(kvb, wk_ref[...], preferred_element_type=jnp.float32) + bk_ref[...]
        v_p = jnp.dot(kvb, wv_ref[...], preferred_element_type=jnp.float32) + bv_ref[...]
        q3 = q_p.reshape(tb, lq, d_model)
        k3 = k_p.reshape(tb, lk, d_model)
        v3 = v_p.reshape(tb, lk, d_model)

        # Per-head scores / softmax / context via static lane-offset slices.
        ctx_parts = []
        for h in range(n_heads):
            sl = slice(h * dh, (h + 1) * dh)
            qh = q3[:, :, sl].astype(jnp.bfloat16)      # (tb, lq, dh)
            kh = k3[:, :, sl].astype(jnp.bfloat16)      # (tb, lk, dh)
            vh = v3[:, :, sl].astype(jnp.bfloat16)      # (tb, lk, dh)
            s = jnp.einsum("bqe,bke->bqk", qh, kh,
                           preferred_element_type=jnp.float32)          # (tb, lq, lk)
            s = s - jnp.max(s, axis=-1, keepdims=True)
            p = jnp.exp(s)
            p = p * pl.reciprocal(jnp.sum(p, axis=-1, keepdims=True), approx=True)
            ctx_parts.append(
                jnp.einsum("bqk,bke->bqe", p.astype(jnp.bfloat16), vh,
                           preferred_element_type=jnp.float32))          # (tb, lq, dh)
        ctx = jnp.concatenate(ctx_parts, axis=-1).reshape(tb * lq, d_model)

        # Single D-wide output projection (full-depth MXU contraction).
        attn = jnp.dot(ctx.astype(jnp.bfloat16), wo_ref[...],
                       preferred_element_type=jnp.float32) + bo_ref[...]

        # Residual + LayerNorm in f32; one contiguous store of the whole block.
        z = qf + attn
        mu = jnp.mean(z, axis=-1, keepdims=True)
        var = jnp.mean(jnp.square(z - mu), axis=-1, keepdims=True)
        zn = (z - mu) * jax.lax.rsqrt(var + eps)
        out = zn * g_ref[...] + beta_ref[...]
        o_ref[...] = out.reshape(tb, lq, d_model).astype(o_ref.dtype)

    return kernel


def _prep_attn_weights(p, idx, n_heads, d_model):
    """Fold softmax scale into Wq/bq; cast MXU weights to bf16; biases/LN stay f32."""
    dh = d_model // n_heads
    scale = 1.0 / math.sqrt(dh)
    f32 = jnp.float32
    return (
        (p[f"wq{idx}"] * scale).astype(jnp.bfloat16),
        p[f"wk{idx}"].astype(jnp.bfloat16),
        p[f"wv{idx}"].astype(jnp.bfloat16),
        p[f"wo{idx}"].astype(jnp.bfloat16),
        (p[f"bq{idx}"] * scale).reshape(1, d_model).astype(f32),
        p[f"bk{idx}"].reshape(1, d_model).astype(f32),
        p[f"bv{idx}"].reshape(1, d_model).astype(f32),
        p[f"bo{idx}"].reshape(1, d_model).astype(f32),
        p[f"ln{idx}_g"].reshape(1, d_model).astype(f32),
        p[f"ln{idx}_b"].reshape(1, d_model).astype(f32),
    )


def _attn_weight_specs(d_model):
    w = lambda: _const_spec((d_model, d_model))
    b = lambda: _const_spec((1, d_model))
    return [w(), w(), w(), w(), b(), b(), b(), b(), b(), b()]


def _pick_tb(batch, lq, lk, d_model, budget_bytes=8 << 20):
    """Batch elements per grid step: fill sublanes / amortize the ~0.35us step
    overhead while keeping the per-step activation footprint small, and keep
    >= 2 parallel steps so both v7x TensorCores get work."""
    per_b = 4 * (2 * 2 * (2 * lq + lk) * d_model     # double-buffered q/kv/out tiles
                 + (2 * lq + 2 * lk) * d_model       # Q/K/V/ctx intermediates
                 + 2 * lq * lk)                      # scores + probs (live head)
    tb = max(1, min(batch, budget_bytes // max(per_b, 1)))
    if batch >= 2:
        tb = min(tb, (batch + 1) // 2)
    return int(tb)


def self_attn_ln(x, weights, n_heads, eps=LN_EPS):
    """LayerNorm(x + MHA(x, x, x)) — the norm1 path (single DMA of x per step)."""
    B, L, D = x.shape
    tb = _pick_tb(B, L, L, D)
    io_spec = pl.BlockSpec((tb, L, D), lambda i: (i, 0, 0))
    return pl.pallas_call(
        _attn_ln_kernel(n_heads, eps, self_attn=True),
        out_shape=jax.ShapeDtypeStruct((B, L, D), x.dtype),
        grid_spec=pltpu.PrefetchScalarGridSpec(
            num_scalar_prefetch=0,
            grid=(pl.cdiv(B, tb),),
            in_specs=[io_spec] + _attn_weight_specs(D),
            out_specs=io_spec,
        ),
        compiler_params=pltpu.CompilerParams(
            dimension_semantics=("parallel",),
            vmem_limit_bytes=VMEM_LIMIT_BYTES),
    )(x, *weights)


def cross_attn_ln(x_glb_ori, cross, weights, n_heads, eps=LN_EPS):
    """LayerNorm(q + MHA(q, cross, cross)) with q = x_glb_ori (Lq == 1) — the
    norm2 path, TB batch elements (= TB query rows) per grid step."""
    B, Lq, D = x_glb_ori.shape
    Lk = cross.shape[1]
    tb = _pick_tb(B, Lq, Lk, D)
    q_spec = pl.BlockSpec((tb, Lq, D), lambda i: (i, 0, 0))
    kv_spec = pl.BlockSpec((tb, Lk, D), lambda i: (i, 0, 0))
    return pl.pallas_call(
        _attn_ln_kernel(n_heads, eps, self_attn=False),
        out_shape=jax.ShapeDtypeStruct((B, Lq, D), x_glb_ori.dtype),
        grid_spec=pltpu.PrefetchScalarGridSpec(
            num_scalar_prefetch=0,
            grid=(pl.cdiv(B, tb),),
            in_specs=[q_spec, kv_spec] + _attn_weight_specs(D),
            out_specs=q_spec,
        ),
        compiler_params=pltpu.CompilerParams(
            dimension_semantics=("parallel",),
            vmem_limit_bytes=VMEM_LIMIT_BYTES),
    )(x_glb_ori, cross, *weights)


# ---------------------------------------------------------------------------
# Kernel 2: fused pointwise FFN (1x1 convs) + residual + LayerNorm, row-tiled
# ---------------------------------------------------------------------------
def _ffn_ln_kernel(eps: float):
    def kernel(x_ref, w1_ref, b1_ref, w2_ref, b2_ref, g_ref, beta_ref, o_ref):
        x = x_ref[...]                                                     # (tm, D) f32
        h = jnp.dot(x.astype(jnp.bfloat16), w1_ref[...],
                    preferred_element_type=jnp.float32) + b1_ref[...]
        h = jnp.maximum(h, 0.0)                                            # relu (conv1, k=1)
        y = jnp.dot(h.astype(jnp.bfloat16), w2_ref[...],
                    preferred_element_type=jnp.float32) + b2_ref[...]      # conv2, k=1
        z = x + y                                                          # residual
        mu = jnp.mean(z, axis=-1, keepdims=True)
        var = jnp.mean(jnp.square(z - mu), axis=-1, keepdims=True)
        zn = (z - mu) * jax.lax.rsqrt(var + eps)
        o_ref[...] = (zn * g_ref[...] + beta_ref[...]).astype(o_ref.dtype)
    return kernel


def ffn_ln_block(x, w1_t, b1, w2_t, b2, gamma, beta, eps=LN_EPS, tm_max=512):
    """LayerNorm(x + conv2(relu(conv1(x)))) — kernel_size=1 convs == per-token MLP."""
    B, L, D = x.shape
    d_ff = w1_t.shape[1]
    BN = B * L
    xf = x.reshape(BN, D)

    # Row tile: big enough to amortize per-step overhead, >= 2 parallel steps for
    # v7x's two TensorCores, no host-side pad (cdiv grid; OOB tail writes dropped).
    if BN <= 8:
        tm = BN
    else:
        tm = min(tm_max, ((((BN + 1) // 2) + 7) // 8) * 8)
    grid = (pl.cdiv(BN, tm),)

    out = pl.pallas_call(
        _ffn_ln_kernel(eps),
        out_shape=jax.ShapeDtypeStruct((BN, D), x.dtype),
        grid_spec=pltpu.PrefetchScalarGridSpec(
            num_scalar_prefetch=0,
            grid=grid,
            in_specs=[
                pl.BlockSpec((tm, D), lambda i: (i, 0)),
                _const_spec((D, d_ff)),
                _const_spec((1, d_ff)),
                _const_spec((d_ff, D)),
                _const_spec((1, D)),
                _const_spec((1, D)),
                _const_spec((1, D)),
            ],
            out_specs=pl.BlockSpec((tm, D), lambda i: (i, 0)),
        ),
        compiler_params=pltpu.CompilerParams(
            dimension_semantics=("parallel",),
            vmem_limit_bytes=VMEM_LIMIT_BYTES),
    )(xf,
      w1_t.astype(jnp.bfloat16), b1.reshape(1, d_ff).astype(jnp.float32),
      w2_t.astype(jnp.bfloat16), b2.reshape(1, D).astype(jnp.float32),
      gamma.reshape(1, D).astype(jnp.float32), beta.reshape(1, D).astype(jnp.float32))
    return out.reshape(B, L, D)


# ---------------------------------------------------------------------------
# Full EncoderLayer forward
# ---------------------------------------------------------------------------
def encoder_layer_forward(x, cross, params, n_heads,
                          x_mask=None, cross_mask=None, tau=None, delta=None):
    # TODO(synk): non-None attention masks and training-mode dropout are not
    # implemented (TimeXer uses FullAttention(mask_flag=False) in eval mode);
    # tau/delta are ignored by FullAttention.
    del x_mask, cross_mask, tau, delta
    p = params
    D = x.shape[-1]

    w_self = _prep_attn_weights(p, "1", n_heads, D)
    w_cross = _prep_attn_weights(p, "2", n_heads, D)

    # x = norm1(x + self_attention(x, x, x))
    x1 = self_attn_ln(x, w_self, n_heads)

    # x_glb = norm2(x_glb_ori + cross_attention(x_glb_ori, cross, cross))
    x_glb_ori = x1[:, -1:, :]
    x_glb = cross_attn_ln(x_glb_ori, cross, w_cross, n_heads)

    # y = x = cat([x[:, :-1, :], x_glb], dim=1)
    # TODO(synk): could be fused into the cross kernel (write row L-1 in place via
    # input_output_aliases) to remove this extra HBM pass of the activations.
    x_cat = jnp.concatenate([x1[:, :-1, :], x_glb], axis=1)

    # norm3(x + conv2(relu(conv1(x))))
    return ffn_ln_block(x_cat, p["w1_t"], p["b1"], p["w2_t"], p["b2"],
                        p["ln3_g"], p["ln3_b"])


# ---------------------------------------------------------------------------
# Pure-JAX reference (highest matmul precision) mirroring the PyTorch forward
# ---------------------------------------------------------------------------
def encoder_layer_reference(x, cross, params, n_heads, eps=LN_EPS):
    p = params
    D = x.shape[-1]
    dh = D // n_heads
    hp = jax.lax.Precision.HIGHEST

    def mm(a, b):
        return jnp.matmul(a, b, precision=hp)

    def ln(z, g, b):
        mu = z.mean(-1, keepdims=True)
        var = ((z - mu) ** 2).mean(-1, keepdims=True)
        return (z - mu) / jnp.sqrt(var + eps) * g + b

    def mha(q_in, kv_in, wq, bq, wk, bk, wv, bv, wo, bo):
        B, Lq, _ = q_in.shape
        Lk = kv_in.shape[1]
        q = (mm(q_in, wq) + bq).reshape(B, Lq, n_heads, dh)
        k = (mm(kv_in, wk) + bk).reshape(B, Lk, n_heads, dh)
        v = (mm(kv_in, wv) + bv).reshape(B, Lk, n_heads, dh)
        s = jnp.einsum("blhe,bshe->bhls", q, k, precision=hp) / math.sqrt(dh)
        a = jax.nn.softmax(s, axis=-1)
        o = jnp.einsum("bhls,bshe->blhe", a, v, precision=hp).reshape(B, Lq, D)
        return mm(o, wo) + bo

    x1 = ln(x + mha(x, x, p["wq1"], p["bq1"], p["wk1"], p["bk1"],
                    p["wv1"], p["bv1"], p["wo1"], p["bo1"]),
            p["ln1_g"], p["ln1_b"])
    x_glb_ori = x1[:, -1:, :]
    x_glb = ln(x_glb_ori + mha(x_glb_ori, cross, p["wq2"], p["bq2"],
                               p["wk2"], p["bk2"], p["wv2"], p["bv2"],
                               p["wo2"], p["bo2"]),
               p["ln2_g"], p["ln2_b"])
    x_cat = jnp.concatenate([x1[:, :-1, :], x_glb], axis=1)
    y = jnp.maximum(mm(x_cat, p["w1_t"]) + p["b1"], 0.0)
    y = mm(y, p["w2_t"]) + p["b2"]
    return ln(x_cat + y, p["ln3_g"], p["ln3_b"])


if __name__ == "__main__":
    # Small shapes consistent with the module.
    B, L_x, L_cross = 2, 8, 16
    d_model, n_heads = 32, 4
    d_ff = 4 * d_model
    dropout = 0.1  # eval-mode identity

    key = jax.random.PRNGKey(0)
    ks = list(jax.random.split(key, 40))
    ki = iter(ks)

    def w(shape, scale=0.1):
        return jax.random.normal(next(ki), shape, dtype=jnp.float32) * scale

    x = jax.random.normal(next(ki), (B, L_x, d_model), dtype=jnp.float32)
    cross = jax.random.normal(next(ki), (B, L_cross, d_model), dtype=jnp.float32)

    params = {
        # self-attention projections (stored transposed: y = x @ W + b)
        "wq1": w((d_model, d_model)), "bq1": w((d_model,)),
        "wk1": w((d_model, d_model)), "bk1": w((d_model,)),
        "wv1": w((d_model, d_model)), "bv1": w((d_model,)),
        "wo1": w((d_model, d_model)), "bo1": w((d_model,)),
        "ln1_g": 1.0 + w((d_model,)), "ln1_b": w((d_model,)),
        # cross-attention projections
        "wq2": w((d_model, d_model)), "bq2": w((d_model,)),
        "wk2": w((d_model, d_model)), "bk2": w((d_model,)),
        "wv2": w((d_model, d_model)), "bv2": w((d_model,)),
        "wo2": w((d_model, d_model)), "bo2": w((d_model,)),
        "ln2_g": 1.0 + w((d_model,)), "ln2_b": w((d_model,)),
        # 1x1 convs (conv1: d_model->d_ff, conv2: d_ff->d_model), transposed
        "w1_t": w((d_model, d_ff)), "b1": w((d_ff,)),
        "w2_t": w((d_ff, d_model)), "b2": w((d_model,)),
        "ln3_g": 1.0 + w((d_model,)), "ln3_b": w((d_model,)),
    }

    out = encoder_layer_forward(x, cross, params, n_heads)
    out = jax.block_until_ready(out)

    ref = jax.block_until_ready(encoder_layer_reference(x, cross, params, n_heads))
    # Tolerance loosened vs the f32 version: kernel matmuls use bf16 MXU inputs
    # (f32 accumulation) while the reference runs at HIGHEST precision.
    np.testing.assert_allclose(np.asarray(out), np.asarray(ref), rtol=2e-2, atol=2e-2)
    assert out.shape == (B, L_x, d_model)

    print("KERNEL_OK")
</pallas_src>

<mosaic_0001>
module attributes {stable_mosaic.version = 11 : i64} {
  func.func @kernel(%arg0: i32, %arg1: memref<1x8x32xf32, #tpu.memory_space<vmem>>, %arg2: memref<32x32xbf16, #tpu.memory_space<vmem>>, %arg3: memref<32x32xbf16, #tpu.memory_space<vmem>>, %arg4: memref<32x32xbf16, #tpu.memory_space<vmem>>, %arg5: memref<32x32xbf16, #tpu.memory_space<vmem>>, %arg6: memref<1x32xf32, #tpu.memory_space<vmem>>, %arg7: memref<1x32xf32, #tpu.memory_space<vmem>>, %arg8: memref<1x32xf32, #tpu.memory_space<vmem>>, %arg9: memref<1x32xf32, #tpu.memory_space<vmem>>, %arg10: memref<1x32xf32, #tpu.memory_space<vmem>>, %arg11: memref<1x32xf32, #tpu.memory_space<vmem>>, %arg12: memref<1x8x32xf32, #tpu.memory_space<vmem>>) attributes {dimension_semantics = [#tpu.dimension_semantics<parallel>], iteration_bounds = array<i64: 2>, scalar_prefetch = 0 : i64, scratch_operands = 0 : i64, tpu.core_type = #tpu.core_type<tc>, window_params = [{transform_indices = @transform_0, window_bounds = array<i64: 1, 8, 32>}, {pipeline_mode = #tpu.pipeline_mode<synchronous>, transform_indices = @transform_1, window_bounds = array<i64: 32, 32>}, {pipeline_mode = #tpu.pipeline_mode<synchronous>, transform_indices = @transform_2, window_bounds = array<i64: 32, 32>}, {pipeline_mode = #tpu.pipeline_mode<synchronous>, transform_indices = @transform_3, window_bounds = array<i64: 32, 32>}, {pipeline_mode = #tpu.pipeline_mode<synchronous>, transform_indices = @transform_4, window_bounds = array<i64: 32, 32>}, {pipeline_mode = #tpu.pipeline_mode<synchronous>, transform_indices = @transform_5, window_bounds = array<i64: 1, 32>}, {pipeline_mode = #tpu.pipeline_mode<synchronous>, transform_indices = @transform_6, window_bounds = array<i64: 1, 32>}, {pipeline_mode = #tpu.pipeline_mode<synchronous>, transform_indices = @transform_7, window_bounds = array<i64: 1, 32>}, {pipeline_mode = #tpu.pipeline_mode<synchronous>, transform_indices = @transform_8, window_bounds = array<i64: 1, 32>}, {pipeline_mode = #tpu.pipeline_mode<synchronous>, transform_indices = @transform_9, window_bounds = array<i64: 1, 32>}, {pipeline_mode = #tpu.pipeline_mode<synchronous>, transform_indices = @transform_10, window_bounds = array<i64: 1, 32>}, {transform_indices = @transform_11, window_bounds = array<i64: 1, 8, 32>}]} {
    %c0 = arith.constant 0 : index
    %c0_0 = arith.constant 0 : index
    %c0_1 = arith.constant 0 : index
    %0 = vector.load %arg1[%c0, %c0_0, %c0_1] : memref<1x8x32xf32, #tpu.memory_space<vmem>>, vector<1x8x32xf32>
    %1 = vector.shape_cast %0 : vector<1x8x32xf32> to vector<8x32xf32>
    %2 = arith.truncf %1 : vector<8x32xf32> to vector<8x32xbf16>
    %c0_2 = arith.constant 0 : index
    %c0_3 = arith.constant 0 : index
    %3 = vector.load %arg2[%c0_2, %c0_3] : memref<32x32xbf16, #tpu.memory_space<vmem>>, vector<32x32xbf16>
    %cst = arith.constant dense<0.000000e+00> : vector<8x32xf32>
    %4 = tpu.matmul %2, %3, %cst {dimension_numbers = #tpu.dot_dimension_numbers<[1], [0], [0], [1], [0, 0, 1, 1], [], []>} : vector<8x32xbf16>, vector<32x32xbf16>, vector<8x32xf32> -> vector<8x32xf32>
    %c0_4 = arith.constant 0 : index
    %c0_5 = arith.constant 0 : index
    %5 = vector.load %arg6[%c0_4, %c0_5] : memref<1x32xf32, #tpu.memory_space<vmem>>, vector<1x32xf32>
    %6 = vector.broadcast %5 : vector<1x32xf32> to vector<8x32xf32>
    %7 = arith.addf %4, %6 : vector<8x32xf32>
    %c0_6 = arith.constant 0 : index
    %c0_7 = arith.constant 0 : index
    %8 = vector.load %arg3[%c0_6, %c0_7] : memref<32x32xbf16, #tpu.memory_space<vmem>>, vector<32x32xbf16>
    %cst_8 = arith.constant dense<0.000000e+00> : vector<8x32xf32>
    %9 = tpu.matmul %2, %8, %cst_8 {dimension_numbers = #tpu.dot_dimension_numbers<[1], [0], [0], [1], [0, 0, 1, 1], [], []>} : vector<8x32xbf16>, vector<32x32xbf16>, vector<8x32xf32> -> vector<8x32xf32>
    %c0_9 = arith.constant 0 : index
    %c0_10 = arith.constant 0 : index
    %10 = vector.load %arg7[%c0_9, %c0_10] : memref<1x32xf32, #tpu.memory_space<vmem>>, vector<1x32xf32>
    %11 = vector.broadcast %10 : vector<1x32xf32> to vector<8x32xf32>
    %12 = arith.addf %9, %11 : vector<8x32xf32>
    %c0_11 = arith.constant 0 : index
    %c0_12 = arith.constant 0 : index
    %13 = vector.load %arg4[%c0_11, %c0_12] : memref<32x32xbf16, #tpu.memory_space<vmem>>, vector<32x32xbf16>
    %cst_13 = arith.constant dense<0.000000e+00> : vector<8x32xf32>
    %14 = tpu.matmul %2, %13, %cst_13 {dimension_numbers = #tpu.dot_dimension_numbers<[1], [0], [0], [1], [0, 0, 1, 1], [], []>} : vector<8x32xbf16>, vector<32x32xbf16>, vector<8x32xf32> -> vector<8x32xf32>
    %c0_14 = arith.constant 0 : index
    %c0_15 = arith.constant 0 : index
    %15 = vector.load %arg8[%c0_14, %c0_15] : memref<1x32xf32, #tpu.memory_space<vmem>>, vector<1x32xf32>
    %16 = vector.broadcast %15 : vector<1x32xf32> to vector<8x32xf32>
    %17 = arith.addf %14, %16 : vector<8x32xf32>
    %18 = vector.shape_cast %7 : vector<8x32xf32> to vector<1x8x32xf32>
    %19 = vector.shape_cast %12 : vector<8x32xf32> to vector<1x8x32xf32>
    %20 = vector.shape_cast %17 : vector<8x32xf32> to vector<1x8x32xf32>
    %21 = vector.extract_strided_slice %18 {offsets = [0, 0, 0], sizes = [1, 8, 8], strides = [1, 1, 1]} : vector<1x8x32xf32> to vector<1x8x8xf32>
    %22 = arith.truncf %21 : vector<1x8x8xf32> to vector<1x8x8xbf16>
    %23 = vector.extract_strided_slice %19 {offsets = [0, 0, 0], sizes = [1, 8, 8], strides = [1, 1, 1]} : vector<1x8x32xf32> to vector<1x8x8xf32>
    %24 = arith.truncf %23 : vector<1x8x8xf32> to vector<1x8x8xbf16>
    %25 = vector.extract_strided_slice %20 {offsets = [0, 0, 0], sizes = [1, 8, 8], strides = [1, 1, 1]} : vector<1x8x32xf32> to vector<1x8x8xf32>
    %26 = arith.truncf %25 : vector<1x8x8xf32> to vector<1x8x8xbf16>
    "tpu.trace_start"() <{level = 10 : i32, message = "bqe,bke->bqk"}> : () -> ()
    %cst_16 = arith.constant dense<0.000000e+00> : vector<1x8x8xf32>
    %27 = tpu.matmul %22, %24, %cst_16 {dimension_numbers = #tpu.dot_dimension_numbers<[2], [2], [1], [1], [0, 0, 0, 1, 1, 1], [0], [0]>} : vector<1x8x8xbf16>, vector<1x8x8xbf16>, vector<1x8x8xf32> -> vector<1x8x8xf32>
    "tpu.trace_stop"() : () -> ()
    %cst_17 = arith.constant dense<0xFF800000> : vector<1x8xf32>
    %28 = vector.multi_reduction <maximumf>, %27, %cst_17 [2] : vector<1x8x8xf32> to vector<1x8xf32>
    %29 = vector.shape_cast %28 : vector<1x8xf32> to vector<1x8x1xf32>
    %30 = vector.broadcast %29 : vector<1x8x1xf32> to vector<1x8x8xf32>
    %31 = arith.subf %27, %30 : vector<1x8x8xf32>
    %32 = math.exp %31 : vector<1x8x8xf32>
    %cst_18 = arith.constant dense<0.000000e+00> : vector<1x8xf32>
    %33 = vector.multi_reduction <add>, %32, %cst_18 [2] : vector<1x8x8xf32> to vector<1x8xf32>
    %34 = vector.shape_cast %33 : vector<1x8xf32> to vector<1x8x1xf32>
    %35 = tpu.reciprocal %34 {approx = true} : vector<1x8x1xf32> -> vector<1x8x1xf32>
    %36 = vector.broadcast %35 : vector<1x8x1xf32> to vector<1x8x8xf32>
    %37 = arith.mulf %32, %36 : vector<1x8x8xf32>
    %38 = arith.truncf %37 : vector<1x8x8xf32> to vector<1x8x8xbf16>
    "tpu.trace_start"() <{level = 10 : i32, message = "bqk,bke->bqe"}> : () -> ()
    %cst_19 = arith.constant dense<0.000000e+00> : vector<1x8x8xf32>
    %39 = tpu.matmul %38, %26, %cst_19 {dimension_numbers = #tpu.dot_dimension_numbers<[2], [1], [1], [2], [0, 0, 0, 1, 1, 2], [0], [0]>} : vector<1x8x8xbf16>, vector<1x8x8xbf16>, vector<1x8x8xf32> -> vector<1x8x8xf32>
    "tpu.trace_stop"() : () -> ()
    %40 = vector.extract_strided_slice %18 {offsets = [0, 0, 8], sizes = [1, 8, 8], strides = [1, 1, 1]} : vector<1x8x32xf32> to vector<1x8x8xf32>
    %41 = arith.truncf %40 : vector<1x8x8xf32> to vector<1x8x8xbf16>
    %42 = vector.extract_strided_slice %19 {offsets = [0, 0, 8], sizes = [1, 8, 8], strides = [1, 1, 1]} : vector<1x8x32xf32> to vector<1x8x8xf32>
    %43 = arith.truncf %42 : vector<1x8x8xf32> to vector<1x8x8xbf16>
    %44 = vector.extract_strided_slice %20 {offsets = [0, 0, 8], sizes = [1, 8, 8], strides = [1, 1, 1]} : vector<1x8x32xf32> to vector<1x8x8xf32>
    %45 = arith.truncf %44 : vector<1x8x8xf32> to vector<1x8x8xbf16>
    "tpu.trace_start"() <{level = 10 : i32, message = "bqe,bke->bqk"}> : () -> ()
    %cst_20 = arith.constant dense<0.000000e+00> : vector<1x8x8xf32>
    %46 = tpu.matmul %41, %43, %cst_20 {dimension_numbers = #tpu.dot_dimension_numbers<[2], [2], [1], [1], [0, 0, 0, 1, 1, 1], [0], [0]>} : vector<1x8x8xbf16>, vector<1x8x8xbf16>, vector<1x8x8xf32> -> vector<1x8x8xf32>
    "tpu.trace_stop"() : () -> ()
    %cst_21 = arith.constant dense<0xFF800000> : vector<1x8xf32>
    %47 = vector.multi_reduction <maximumf>, %46, %cst_21 [2] : vector<1x8x8xf32> to vector<1x8xf32>
    %48 = vector.shape_cast %47 : vector<1x8xf32> to vector<1x8x1xf32>
    %49 = vector.broadcast %48 : vector<1x8x1xf32> to vector<1x8x8xf32>
    %50 = arith.subf %46, %49 : vector<1x8x8xf32>
    %51 = math.exp %50 : vector<1x8x8xf32>
    %cst_22 = arith.constant dense<0.000000e+00> : vector<1x8xf32>
    %52 = vector.multi_reduction <add>, %51, %cst_22 [2] : vector<1x8x8xf32> to vector<1x8xf32>
    %53 = vector.shape_cast %52 : vector<1x8xf32> to vector<1x8x1xf32>
    %54 = tpu.reciprocal %53 {approx = true} : vector<1x8x1xf32> -> vector<1x8x1xf32>
    %55 = vector.broadcast %54 : vector<1x8x1xf32> to vector<1x8x8xf32>
    %56 = arith.mulf %51, %55 : vector<1x8x8xf32>
    %57 = arith.truncf %56 : vector<1x8x8xf32> to vector<1x8x8xbf16>
    "tpu.trace_start"() <{level = 10 : i32, message = "bqk,bke->bqe"}> : () -> ()
    %cst_23 = arith.constant dense<0.000000e+00> : vector<1x8x8xf32>
    %58 = tpu.matmul %57, %45, %cst_23 {dimension_numbers = #tpu.dot_dimension_numbers<[2], [1], [1], [2], [0, 0, 0, 1, 1, 2], [0], [0]>} : vector<1x8x8xbf16>, vector<1x8x8xbf16>, vector<1x8x8xf32> -> vector<1x8x8xf32>
    "tpu.trace_stop"() : () -> ()
    %59 = vector.extract_strided_slice %18 {offsets = [0, 0, 16], sizes = [1, 8, 8], strides = [1, 1, 1]} : vector<1x8x32xf32> to vector<1x8x8xf32>
    %60 = arith.truncf %59 : vector<1x8x8xf32> to vector<1x8x8xbf16>
    %61 = vector.extract_strided_slice %19 {offsets = [0, 0, 16], sizes = [1, 8, 8], strides = [1, 1, 1]} : vector<1x8x32xf32> to vector<1x8x8xf32>
    %62 = arith.truncf %61 : vector<1x8x8xf32> to vector<1x8x8xbf16>
    %63 = vector.extract_strided_slice %20 {offsets = [0, 0, 16], sizes = [1, 8, 8], strides = [1, 1, 1]} : vector<1x8x32xf32> to vector<1x8x8xf32>
    %64 = arith.truncf %63 : vector<1x8x8xf32> to vector<1x8x8xbf16>
    "tpu.trace_start"() <{level = 10 : i32, message = "bqe,bke->bqk"}> : () -> ()
    %cst_24 = arith.constant dense<0.000000e+00> : vector<1x8x8xf32>
    %65 = tpu.matmul %60, %62, %cst_24 {dimension_numbers = #tpu.dot_dimension_numbers<[2], [2], [1], [1], [0, 0, 0, 1, 1, 1], [0], [0]>} : vector<1x8x8xbf16>, vector<1x8x8xbf16>, vector<1x8x8xf32> -> vector<1x8x8xf32>
    "tpu.trace_stop"() : () -> ()
    %cst_25 = arith.constant dense<0xFF800000> : vector<1x8xf32>
    %66 = vector.multi_reduction <maximumf>, %65, %cst_25 [2] : vector<1x8x8xf32> to vector<1x8xf32>
    %67 = vector.shape_cast %66 : vector<1x8xf32> to vector<1x8x1xf32>
    %68 = vector.broadcast %67 : vector<1x8x1xf32> to vector<1x8x8xf32>
    %69 = arith.subf %65, %68 : vector<1x8x8xf32>
    %70 = math.exp %69 : vector<1x8x8xf32>
    %cst_26 = arith.constant dense<0.000000e+00> : vector<1x8xf32>
    %71 = vector.multi_reduction <add>, %70, %cst_26 [2] : vector<1x8x8xf32> to vector<1x8xf32>
    %72 = vector.shape_cast %71 : vector<1x8xf32> to vector<1x8x1xf32>
    %73 = tpu.reciprocal %72 {approx = true} : vector<1x8x1xf32> -> vector<1x8x1xf32>
    %74 = vector.broadcast %73 : vector<1x8x1xf32> to vector<1x8x8xf32>
    %75 = arith.mulf %70, %74 : vector<1x8x8xf32>
    %76 = arith.truncf %75 : vector<1x8x8xf32> to vector<1x8x8xbf16>
    "tpu.trace_start"() <{level = 10 : i32, message = "bqk,bke->bqe"}> : () -> ()
    %cst_27 = arith.constant dense<0.000000e+00> : vector<1x8x8xf32>
    %77 = tpu.matmul %76, %64, %cst_27 {dimension_numbers = #tpu.dot_dimension_numbers<[2], [1], [1], [2], [0, 0, 0, 1, 1, 2], [0], [0]>} : vector<1x8x8xbf16>, vector<1x8x8xbf16>, vector<1x8x8xf32> -> vector<1x8x8xf32>
    "tpu.trace_stop"() : () -> ()
    %78 = vector.extract_strided_slice %18 {offsets = [0, 0, 24], sizes = [1, 8, 8], strides = [1, 1, 1]} : vector<1x8x32xf32> to vector<1x8x8xf32>
    %79 = arith.truncf %78 : vector<1x8x8xf32> to vector<1x8x8xbf16>
    %80 = vector.extract_strided_slice %19 {offsets = [0, 0, 24], sizes = [1, 8, 8], strides = [1, 1, 1]} : vector<1x8x32xf32> to vector<1x8x8xf32>
    %81 = arith.truncf %80 : vector<1x8x8xf32> to vector<1x8x8xbf16>
    %82 = vector.extract_strided_slice %20 {offsets = [0, 0, 24], sizes = [1, 8, 8], strides = [1, 1, 1]} : vector<1x8x32xf32> to vector<1x8x8xf32>
    %83 = arith.truncf %82 : vector<1x8x8xf32> to vector<1x8x8xbf16>
    "tpu.trace_start"() <{level = 10 : i32, message = "bqe,bke->bqk"}> : () -> ()
    %cst_28 = arith.constant dense<0.000000e+00> : vector<1x8x8xf32>
    %84 = tpu.matmul %79, %81, %cst_28 {dimension_numbers = #tpu.dot_dimension_numbers<[2], [2], [1], [1], [0, 0, 0, 1, 1, 1], [0], [0]>} : vector<1x8x8xbf16>, vector<1x8x8xbf16>, vector<1x8x8xf32> -> vector<1x8x8xf32>
    "tpu.trace_stop"() : () -> ()
    %cst_29 = arith.constant dense<0xFF800000> : vector<1x8xf32>
    %85 = vector.multi_reduction <maximumf>, %84, %cst_29 [2] : vector<1x8x8xf32> to vector<1x8xf32>
    %86 = vector.shape_cast %85 : vector<1x8xf32> to vector<1x8x1xf32>
    %87 = vector.broadcast %86 : vector<1x8x1xf32> to vector<1x8x8xf32>
    %88 = arith.subf %84, %87 : vector<1x8x8xf32>
    %89 = math.exp %88 : vector<1x8x8xf32>
    %cst_30 = arith.constant dense<0.000000e+00> : vector<1x8xf32>
    %90 = vector.multi_reduction <add>, %89, %cst_30 [2] : vector<1x8x8xf32> to vector<1x8xf32>
    %91 = vector.shape_cast %90 : vector<1x8xf32> to vector<1x8x1xf32>
    %92 = tpu.reciprocal %91 {approx = true} : vector<1x8x1xf32> -> vector<1x8x1xf32>
    %93 = vector.broadcast %92 : vector<1x8x1xf32> to vector<1x8x8xf32>
    %94 = arith.mulf %89, %93 : vector<1x8x8xf32>
    %95 = arith.truncf %94 : vector<1x8x8xf32> to vector<1x8x8xbf16>
    "tpu.trace_start"() <{level = 10 : i32, message = "bqk,bke->bqe"}> : () -> ()
    %cst_31 = arith.constant dense<0.000000e+00> : vector<1x8x8xf32>
    %96 = tpu.matmul %95, %83, %cst_31 {dimension_numbers = #tpu.dot_dimension_numbers<[2], [1], [1], [2], [0, 0, 0, 1, 1, 2], [0], [0]>} : vector<1x8x8xbf16>, vector<1x8x8xbf16>, vector<1x8x8xf32> -> vector<1x8x8xf32>
    "tpu.trace_stop"() : () -> ()
    %97 = tpu.concatenate %39, %58, %77, %96 in 2 : vector<1x8x8xf32>, vector<1x8x8xf32>, vector<1x8x8xf32>, vector<1x8x8xf32> -> vector<1x8x32xf32>
    %98 = vector.shape_cast %97 : vector<1x8x32xf32> to vector<8x32xf32>
    %99 = arith.truncf %98 : vector<8x32xf32> to vector<8x32xbf16>
    %c0_32 = arith.constant 0 : index
    %c0_33 = arith.constant 0 : index
    %100 = vector.load %arg5[%c0_32, %c0_33] : memref<32x32xbf16, #tpu.memory_space<vmem>>, vector<32x32xbf16>
    %cst_34 = arith.constant dense<0.000000e+00> : vector<8x32xf32>
    %101 = tpu.matmul %99, %100, %cst_34 {dimension_numbers = #tpu.dot_dimension_numbers<[1], [0], [0], [1], [0, 0, 1, 1], [], []>} : vector<8x32xbf16>, vector<32x32xbf16>, vector<8x32xf32> -> vector<8x32xf32>
    %c0_35 = arith.constant 0 : index
    %c0_36 = arith.constant 0 : index
    %102 = vector.load %arg9[%c0_35, %c0_36] : memref<1x32xf32, #tpu.memory_space<vmem>>, vector<1x32xf32>
    %103 = vector.broadcast %102 : vector<1x32xf32> to vector<8x32xf32>
    %104 = arith.addf %101, %103 : vector<8x32xf32>
    %105 = arith.addf %1, %104 : vector<8x32xf32>
    %cst_37 = arith.constant dense<0.000000e+00> : vector<8xf32>
    %106 = vector.multi_reduction <add>, %105, %cst_37 [1] : vector<8x32xf32> to vector<8xf32>
    %107 = vector.shape_cast %106 : vector<8xf32> to vector<8x1xf32>
    %cst_38 = arith.constant 3.200000e+01 : f32
    %108 = vector.broadcast %cst_38 : f32 to vector<8x1xf32>
    %109 = arith.divf %107, %108 : vector<8x1xf32>
    %110 = vector.broadcast %109 : vector<8x1xf32> to vector<8x32xf32>
    %111 = arith.subf %105, %110 : vector<8x32xf32>
    %112 = arith.mulf %111, %111 : vector<8x32xf32>
    %cst_39 = arith.constant dense<0.000000e+00> : vector<8xf32>
    %113 = vector.multi_reduction <add>, %112, %cst_39 [1] : vector<8x32xf32> to vector<8xf32>
    %114 = vector.shape_cast %113 : vector<8xf32> to vector<8x1xf32>
    %cst_40 = arith.constant 3.200000e+01 : f32
    %115 = vector.broadcast %cst_40 : f32 to vector<8x1xf32>
    %116 = arith.divf %114, %115 : vector<8x1xf32>
    %117 = vector.broadcast %109 : vector<8x1xf32> to vector<8x32xf32>
    %118 = arith.subf %105, %117 : vector<8x32xf32>
    %cst_41 = arith.constant 9.99999974E-6 : f32
    %119 = vector.broadcast %cst_41 : f32 to vector<8x1xf32>
    %120 = arith.addf %116, %119 : vector<8x1xf32>
    %121 = math.rsqrt %120 : vector<8x1xf32>
    %122 = vector.broadcast %121 : vector<8x1xf32> to vector<8x32xf32>
    %123 = arith.mulf %118, %122 : vector<8x32xf32>
    %c0_42 = arith.constant 0 : index
    %c0_43 = arith.constant 0 : index
    %124 = vector.load %arg10[%c0_42, %c0_43] : memref<1x32xf32, #tpu.memory_space<vmem>>, vector<1x32xf32>
    %125 = vector.broadcast %124 : vector<1x32xf32> to vector<8x32xf32>
    %126 = arith.mulf %123, %125 : vector<8x32xf32>
    %c0_44 = arith.constant 0 : index
    %c0_45 = arith.constant 0 : index
    %127 = vector.load %arg11[%c0_44, %c0_45] : memref<1x32xf32, #tpu.memory_space<vmem>>, vector<1x32xf32>
    %128 = vector.broadcast %127 : vector<1x32xf32> to vector<8x32xf32>
    %129 = arith.addf %126, %128 : vector<8x32xf32>
    %130 = vector.shape_cast %129 : vector<8x32xf32> to vector<1x8x32xf32>
    %c0_46 = arith.constant 0 : index
    %c0_47 = arith.constant 0 : index
    %c0_48 = arith.constant 0 : index
    %131 = vector.load %arg12[%c0_46, %c0_47, %c0_48] : memref<1x8x32xf32, #tpu.memory_space<vmem>>, vector<1x8x32xf32>
    tpu.vector_store %arg12[%c0_46, %c0_47, %c0_48], %130 {strides = array<i32>} : memref<1x8x32xf32, #tpu.memory_space<vmem>>, vector<1x8x32xf32>,
    return
  }
  func.func @transform_0(%arg0: i32) -> (i32, i32, i32) {
    %c0_i32 = arith.constant 0 : i32
    %c0_i32_0 = arith.constant 0 : i32
    %c0_i32_1 = arith.constant 0 : i32
    return %arg0, %c0_i32, %c0_i32_0 : i32, i32, i32
  }
  func.func @transform_1(%arg0: i32) -> (i32, i32) {
    %c0_i32 = arith.constant 0 : i32
    %c0_i32_0 = arith.constant 0 : i32
    %c0_i32_1 = arith.constant 0 : i32
    return %c0_i32, %c0_i32_0 : i32, i32
  }
  func.func @transform_2(%arg0: i32) -> (i32, i32) {
    %c0_i32 = arith.constant 0 : i32
    %c0_i32_0 = arith.constant 0 : i32
    %c0_i32_1 = arith.constant 0 : i32
    return %c0_i32, %c0_i32_0 : i32, i32
  }
  func.func @transform_3(%arg0: i32) -> (i32, i32) {
    %c0_i32 = arith.constant 0 : i32
    %c0_i32_0 = arith.constant 0 : i32
    %c0_i32_1 = arith.constant 0 : i32
    return %c0_i32, %c0_i32_0 : i32, i32
  }
  func.func @transform_4(%arg0: i32) -> (i32, i32) {
    %c0_i32 = arith.constant 0 : i32
    %c0_i32_0 = arith.constant 0 : i32
    %c0_i32_1 = arith.constant 0 : i32
    return %c0_i32, %c0_i32_0 : i32, i32
  }
  func.func @transform_5(%arg0: i32) -> (i32, i32) {
    %c0_i32 = arith.constant 0 : i32
    %c0_i32_0 = arith.constant 0 : i32
    %c0_i32_1 = arith.constant 0 : i32
    return %c0_i32, %c0_i32_0 : i32, i32
  }
  func.func @transform_6(%arg0: i32) -> (i32, i32) {
    %c0_i32 = arith.constant 0 : i32
    %c0_i32_0 = arith.constant 0 : i32
    %c0_i32_1 = arith.constant 0 : i32
    return %c0_i32, %c0_i32_0 : i32, i32
  }
  func.func @transform_7(%arg0: i32) -> (i32, i32) {
    %c0_i32 = arith.constant 0 : i32
    %c0_i32_0 = arith.constant 0 : i32
    %c0_i32_1 = arith.constant 0 : i32
    return %c0_i32, %c0_i32_0 : i32, i32
  }
  func.func @transform_8(%arg0: i32) -> (i32, i32) {
    %c0_i32 = arith.constant 0 : i32
    %c0_i32_0 = arith.constant 0 : i32
    %c0_i32_1 = arith.constant 0 : i32
    return %c0_i32, %c0_i32_0 : i32, i32
  }
  func.func @transform_9(%arg0: i32) -> (i32, i32) {
    %c0_i32 = arith.constant 0 : i32
    %c0_i32_0 = arith.constant 0 : i32
    %c0_i32_1 = arith.constant 0 : i32
    return %c0_i32, %c0_i32_0 : i32, i32
  }
  func.func @transform_10(%arg0: i32) -> (i32, i32) {
    %c0_i32 = arith.constant 0 : i32
    %c0_i32_0 = arith.constant 0 : i32
    %c0_i32_1 = arith.constant 0 : i32
    return %c0_i32, %c0_i32_0 : i32, i32
  }
  func.func @transform_11(%arg0: i32) -> (i32, i32, i32) {
    %c0_i32 = arith.constant 0 : i32
    %c0_i32_0 = arith.constant 0 : i32
    %c0_i32_1 = arith.constant 0 : i32
    return %arg0, %c0_i32, %c0_i32_0 : i32, i32, i32
  }
}

</mosaic_0001>

<llo_original>
// kernel: tpu_custom_call.1
$region0: #{tpu_custom_call.1}
  #allocation0 [shape = 'u32[]', space=smem, size = 0x4, offset = 0x4, fixed_abs, tag = 'smem constant byte address 0x4 - core index']
  #allocation1 [shape = 'u32[144,128]{1,0:T(1,128)}', space=vmem, size = 0x12000, scoped, tag = 'internal scratch']
  %s0 = inlined_call_operand.hbm [shape: f32[2,8,32], index: 0, kind: input, shape index: {}]
  %s1 = inlined_call_operand.hbm [shape: bf16[32,32], index: 1, kind: input, shape index: {}]
  %s2 = inlined_call_operand.hbm [shape: bf16[32,32], index: 2, kind: input, shape index: {}]
  %s3 = inlined_call_operand.hbm [shape: bf16[32,32], index: 3, kind: input, shape index: {}]
  %s4 = inlined_call_operand.hbm [shape: bf16[32,32], index: 4, kind: input, shape index: {}]
  %s5 = inlined_call_operand.vmem [shape: f32[1,32], index: 5, kind: input, shape index: {}]
  %s6 = inlined_call_operand.vmem [shape: f32[1,32], index: 6, kind: input, shape index: {}]
  %s7 = inlined_call_operand.vmem [shape: f32[1,32], index: 7, kind: input, shape index: {}]
  %s8 = inlined_call_operand.vmem [shape: f32[1,32], index: 8, kind: input, shape index: {}]
  %s9 = inlined_call_operand.vmem [shape: f32[1,32], index: 9, kind: input, shape index: {}]
  %s10 = inlined_call_operand.vmem [shape: f32[1,32], index: 10, kind: input, shape index: {}]
  %s11 = inlined_call_operand.hbm [shape: f32[2,8,32], index: 11, kind: output, shape index: {}]
  %s12 = sld [smem:[#allocation0]]
  $region97: #{tpu_custom_call.1} parent=0
    _
  %s14 = ssub.s32 1, %s12
  %s15 = scalar_select 0, %s14, %s12
  $region1: #{tpu_custom_call.1} parent=0
    #allocation2 [shape = 'u8[8192]{0}', space=vmem, size = 0x2000, scoped, tag = 'input window, operand 0']
    #allocation3 [shape = 's32[2]{0}', space=sflag, size = 0x8, scoped, tag = 'scoped memory for tpu_custom_call.1']
    #allocation4 [shape = 's32[2]{0}', space=sflag, size = 0x8, scoped, tag = 'scoped memory for tpu_custom_call.1']
    #allocation5 [shape = 'u8[8192]{0}', space=vmem, size = 0x2000, scoped, tag = 'input window, operand 1, single buffered']
    #allocation6 [shape = 's32[1]{0}', space=sflag, size = 0x4, scoped, tag = 'scoped memory for tpu_custom_call.1']
    #allocation7 [shape = 'u8[8192]{0}', space=vmem, size = 0x2000, scoped, tag = 'input window, operand 2, single buffered']
    #allocation8 [shape = 'u8[8192]{0}', space=vmem, size = 0x2000, scoped, tag = 'input window, operand 3, single buffered']
    #allocation9 [shape = 's32[1]{0}', space=sflag, size = 0x4, scoped, tag = 'scoped memory for tpu_custom_call.1']
    #allocation10 [shape = 'u8[8192]{0}', space=vmem, size = 0x2000, scoped, tag = 'input window, operand 4, single buffered']
    #allocation11 [shape = 'u8[8192]{0}', space=vmem, size = 0x2000, scoped, tag = 'output window, operand 0']
    %16 = vsyncpa [#allocation3], 0
    %s17 = scalar_lea.sflag [#allocation3], 1
    %18 = vsyncpa %s17, 0
    %19 = vsyncpa [#allocation6], 0
    %20 = vsyncpa [#allocation9], 0
    %21 = vsyncpa [#allocation4], 0
    %s22 = scalar_lea.sflag [#allocation4], 1
    %23 = vsyncpa %s22, 0
    loop: start=0, step=1, limit=4
    $region2: #{tpu_custom_call.1} parent=1 // loop_pre_header
      _
    $region3: #{tpu_custom_call.1} parent=1 // loop_header
      %s25 = sphi 0, %s29
      %p26 = scmp.ge.s32.totalorder %s25, 4
      %s35 = sphi 0, %s37
      %s38 = sphi 0, %s35
      %s39 = sphi 0, %s38
      %s55 = sphi 0, %s39
      %s59 = sphi 0, %s59
      %s61 = sphi 0, %s59
      %s62 = sphi 0, %s61
      %s76 = sphi 0, %s62
      %s80 = sphi 0, %s80
      %s82 = sphi 0, %s80
      %s83 = sphi 0, %s82
      %s97 = sphi 0, %s83
      %s101 = sphi 0, %s101
      %s103 = sphi 0, %s101
      %s104 = sphi 0, %s103
      %s118 = sphi 0, %s104
      %s122 = sphi 0, %s122
      %s124 = sphi 0, %s122
      %s125 = sphi 0, %s124
      %s139 = sphi 0, %s125
      %s143 = sphi 0, %s143
      %s145 = sphi 0, %s143
      %s146 = sphi 0, %s145
      %s160 = sphi 0, %s146
      %s164 = sphi 0, %s164
      %s166 = sphi 0, %s164
      %s167 = sphi 0, %s166
      %s181 = sphi 0, %s167
      %s185 = sphi 0, %s185
      %s187 = sphi 0, %s185
      %s188 = sphi 0, %s187
      %s202 = sphi 0, %s188
      %s206 = sphi 0, %s206
      %s208 = sphi 0, %s206
      %s209 = sphi 0, %s208
      %s223 = sphi 0, %s209
      %s227 = sphi 0, %s227
      %s229 = sphi 0, %s227
      %s230 = sphi 0, %s229
      %s244 = sphi 0, %s230
      %s248 = sphi 0, %s248
      %s250 = sphi 0, %s248
      %s251 = sphi 0, %s250
      %s265 = sphi 0, %s251
      %s271 = sphi 0, %s273
      %s274 = sphi 0, %s271
      %s275 = sphi 0, %s274
      %s291 = sphi 0, %s275
    $region4: #{tpu_custom_call.1} parent=1 // loop_header_branch
      %28 = sbr.rel (%p26) target = $region8
    $region5: #{tpu_custom_call.1} parent=1 // loop_body
      %s30 = ssub.s32 %s25, 1
      %s31 = ssub.s32 %s25, 2
      %s32 = sadd.s32 %s25, 1
      %s33 = ssub.s32 %s25, %s32
      %p34 = scmp.eq.s32.totalorder %s33, 0
      %s36 = sadd.s32 %s35, 1
      %s37 = scalar_select %p34, %s35, %s36
      %p40 = pneg %p34
      %p41 = scmp.eq.s32.totalorder %s25, 1
      %p42 = por %p40, %p41
      %p43 = scmp.ne.s32.totalorder %s35, %s38
      %p44 = scmp.eq.s32.totalorder %s25, 0
      %p45 = por %p43, %p44
      %p46 = scmp.ne.s32.totalorder %s35, %s38
      %p47 = scmp.eq.s32.totalorder %s30, 1
      %p48 = por %p46, %p47
      %p49 = scmp.ne.s32.totalorder %s38, %s39
      %p50 = scmp.eq.s32.totalorder %s30, 0
      %p51 = por %p49, %p50
      %p52 = scmp.ne.s32.totalorder %s38, %s39
      %p53 = scmp.eq.s32.totalorder %s31, 1
      %p54 = por %p52, %p53
      %p56 = scmp.ne.s32.totalorder %s39, %s55
      %p57 = scmp.eq.s32.totalorder %s31, 0
      %p58 = por %p56, %p57
      %s60 = sadd.s32 %s59, 1
      %p63 = scmp.eq.s32.totalorder %s25, 1
      %p64 = scmp.ne.s32.totalorder %s59, %s61
      %p65 = scmp.eq.s32.totalorder %s25, 0
      %p66 = por %p64, %p65
      %p67 = scmp.ne.s32.totalorder %s59, %s61
      %p68 = scmp.eq.s32.totalorder %s30, 1
      %p69 = por %p67, %p68
      %p70 = scmp.ne.s32.totalorder %s61, %s62
      %p71 = scmp.eq.s32.totalorder %s30, 0
      %p72 = por %p70, %p71
      %p73 = scmp.ne.s32.totalorder %s61, %s62
      %p74 = scmp.eq.s32.totalorder %s31, 1
      %p75 = por %p73, %p74
      %p77 = scmp.ne.s32.totalorder %s62, %s76
      %p78 = scmp.eq.s32.totalorder %s31, 0
      %p79 = por %p77, %p78
      %s81 = sadd.s32 %s80, 1
      %p84 = scmp.eq.s32.totalorder %s25, 1
      %p85 = scmp.ne.s32.totalorder %s80, %s82
      %p86 = scmp.eq.s32.totalorder %s25, 0
      %p87 = por %p85, %p86
      %p88 = scmp.ne.s32.totalorder %s80, %s82
      %p89 = scmp.eq.s32.totalorder %s30, 1
      %p90 = por %p88, %p89
      %p91 = scmp.ne.s32.totalorder %s82, %s83
      %p92 = scmp.eq.s32.totalorder %s30, 0
      %p93 = por %p91, %p92
      %p94 = scmp.ne.s32.totalorder %s82, %s83
      %p95 = scmp.eq.s32.totalorder %s31, 1
      %p96 = por %p94, %p95
      %p98 = scmp.ne.s32.totalorder %s83, %s97
      %p99 = scmp.eq.s32.totalorder %s31, 0
      %p100 = por %p98, %p99
      %s102 = sadd.s32 %s101, 1
      %p105 = scmp.eq.s32.totalorder %s25, 1
      %p106 = scmp.ne.s32.totalorder %s101, %s103
      %p107 = scmp.eq.s32.totalorder %s25, 0
      %p108 = por %p106, %p107
      %p109 = scmp.ne.s32.totalorder %s101, %s103
      %p110 = scmp.eq.s32.totalorder %s30, 1
      %p111 = por %p109, %p110
      %p112 = scmp.ne.s32.totalorder %s103, %s104
      %p113 = scmp.eq.s32.totalorder %s30, 0
      %p114 = por %p112, %p113
      %p115 = scmp.ne.s32.totalorder %s103, %s104
      %p116 = scmp.eq.s32.totalorder %s31, 1
      %p117 = por %p115, %p116
      %p119 = scmp.ne.s32.totalorder %s104, %s118
      %p120 = scmp.eq.s32.totalorder %s31, 0
      %p121 = por %p119, %p120
      %s123 = sadd.s32 %s122, 1
      %p126 = scmp.eq.s32.totalorder %s25, 1
      %p127 = scmp.ne.s32.totalorder %s122, %s124
      %p128 = scmp.eq.s32.totalorder %s25, 0
      %p129 = por %p127, %p128
      %p130 = scmp.ne.s32.totalorder %s122, %s124
      %p131 = scmp.eq.s32.totalorder %s30, 1
      %p132 = por %p130, %p131
      %p133 = scmp.ne.s32.totalorder %s124, %s125
      %p134 = scmp.eq.s32.totalorder %s30, 0
      %p135 = por %p133, %p134
      %p136 = scmp.ne.s32.totalorder %s124, %s125
      %p137 = scmp.eq.s32.totalorder %s31, 1
      %p138 = por %p136, %p137
      %p140 = scmp.ne.s32.totalorder %s125, %s139
      %p141 = scmp.eq.s32.totalorder %s31, 0
      %p142 = por %p140, %p141
      %s144 = sadd.s32 %s143, 1
      %p147 = scmp.eq.s32.totalorder %s25, 1
      %p148 = scmp.ne.s32.totalorder %s143, %s145
      %p149 = scmp.eq.s32.totalorder %s25, 0
      %p150 = por %p148, %p149
      %p151 = scmp.ne.s32.totalorder %s143, %s145
      %p152 = scmp.eq.s32.totalorder %s30, 1
      %p153 = por %p151, %p152
      %p154 = scmp.ne.s32.totalorder %s145, %s146
      %p155 = scmp.eq.s32.totalorder %s30, 0
      %p156 = por %p154, %p155
      %p157 = scmp.ne.s32.totalorder %s145, %s146
      %p158 = scmp.eq.s32.totalorder %s31, 1
      %p159 = por %p157, %p158
      %p161 = scmp.ne.s32.totalorder %s146, %s160
      %p162 = scmp.eq.s32.totalorder %s31, 0
      %p163 = por %p161, %p162
      %s165 = sadd.s32 %s164, 1
      %p168 = scmp.eq.s32.totalorder %s25, 1
      %p169 = scmp.ne.s32.totalorder %s164, %s166
      %p170 = scmp.eq.s32.totalorder %s25, 0
      %p171 = por %p169, %p170
      %p172 = scmp.ne.s32.totalorder %s164, %s166
      %p173 = scmp.eq.s32.totalorder %s30, 1
      %p174 = por %p172, %p173
      %p175 = scmp.ne.s32.totalorder %s166, %s167
      %p176 = scmp.eq.s32.totalorder %s30, 0
      %p177 = por %p175, %p176
      %p178 = scmp.ne.s32.totalorder %s166, %s167
      %p179 = scmp.eq.s32.totalorder %s31, 1
      %p180 = por %p178, %p179
      %p182 = scmp.ne.s32.totalorder %s167, %s181
      %p183 = scmp.eq.s32.totalorder %s31, 0
      %p184 = por %p182, %p183
      %s186 = sadd.s32 %s185, 1
      %p189 = scmp.eq.s32.totalorder %s25, 1
      %p190 = scmp.ne.s32.totalorder %s185, %s187
      %p191 = scmp.eq.s32.totalorder %s25, 0
      %p192 = por %p190, %p191
      %p193 = scmp.ne.s32.totalorder %s185, %s187
      %p194 = scmp.eq.s32.totalorder %s30, 1
      %p195 = por %p193, %p194
      %p196 = scmp.ne.s32.totalorder %s187, %s188
      %p197 = scmp.eq.s32.totalorder %s30, 0
      %p198 = por %p196, %p197
      %p199 = scmp.ne.s32.totalorder %s187, %s188
      %p200 = scmp.eq.s32.totalorder %s31, 1
      %p201 = por %p199, %p200
      %p203 = scmp.ne.s32.totalorder %s188, %s202
      %p204 = scmp.eq.s32.totalorder %s31, 0
      %p205 = por %p203, %p204
      %s207 = sadd.s32 %s206, 1
      %p210 = scmp.eq.s32.totalorder %s25, 1
      %p211 = scmp.ne.s32.totalorder %s206, %s208
      %p212 = scmp.eq.s32.totalorder %s25, 0
      %p213 = por %p211, %p212
      %p214 = scmp.ne.s32.totalorder %s206, %s208
      %p215 = scmp.eq.s32.totalorder %s30, 1
      %p216 = por %p214, %p215
      %p217 = scmp.ne.s32.totalorder %s208, %s209
      %p218 = scmp.eq.s32.totalorder %s30, 0
      %p219 = por %p217, %p218
      %p220 = scmp.ne.s32.totalorder %s208, %s209
      %p221 = scmp.eq.s32.totalorder %s31, 1
      %p222 = por %p220, %p221
      %p224 = scmp.ne.s32.totalorder %s209, %s223
      %p225 = scmp.eq.s32.totalorder %s31, 0
      %p226 = por %p224, %p225
      %s228 = sadd.s32 %s227, 1
      %p231 = scmp.eq.s32.totalorder %s25, 1
      %p232 = scmp.ne.s32.totalorder %s227, %s229
      %p233 = scmp.eq.s32.totalorder %s25, 0
      %p234 = por %p232, %p233
      %p235 = scmp.ne.s32.totalorder %s227, %s229
      %p236 = scmp.eq.s32.totalorder %s30, 1
      %p237 = por %p235, %p236
      %p238 = scmp.ne.s32.totalorder %s229, %s230
      %p239 = scmp.eq.s32.totalorder %s30, 0
      %p240 = por %p238, %p239
      %p241 = scmp.ne.s32.totalorder %s229, %s230
      %p242 = scmp.eq.s32.totalorder %s31, 1
      %p243 = por %p241, %p242
      %p245 = scmp.ne.s32.totalorder %s230, %s244
      %p246 = scmp.eq.s32.totalorder %s31, 0
      %p247 = por %p245, %p246
      %s249 = sadd.s32 %s248, 1
      %p252 = scmp.eq.s32.totalorder %s25, 1
      %p253 = scmp.ne.s32.totalorder %s248, %s250
      %p254 = scmp.eq.s32.totalorder %s25, 0
      %p255 = por %p253, %p254
      %p256 = scmp.ne.s32.totalorder %s248, %s250
      %p257 = scmp.eq.s32.totalorder %s30, 1
      %p258 = por %p256, %p257
      %p259 = scmp.ne.s32.totalorder %s250, %s251
      %p260 = scmp.eq.s32.totalorder %s30, 0
      %p261 = por %p259, %p260
      %p262 = scmp.ne.s32.totalorder %s250, %s251
      %p263 = scmp.eq.s32.totalorder %s31, 1
      %p264 = por %p262, %p263
      %p266 = scmp.ne.s32.totalorder %s251, %s265
      %p267 = scmp.eq.s32.totalorder %s31, 0
      %p268 = por %p266, %p267
      %s269 = ssub.s32 %s25, %s32
      %p270 = scmp.eq.s32.totalorder %s269, 0
      %s272 = sadd.s32 %s271, 1
      %s273 = scalar_select %p270, %s271, %s272
      %p276 = pneg %p270
      %p277 = scmp.eq.s32.totalorder %s25, 1
      %p278 = por %p276, %p277
      %p279 = scmp.ne.s32.totalorder %s271, %s274
      %p280 = scmp.eq.s32.totalorder %s25, 0
      %p281 = por %p279, %p280
      %p282 = scmp.ne.s32.totalorder %s271, %s274
      %p283 = scmp.eq.s32.totalorder %s30, 1
      %p284 = por %p282, %p283
      %p285 = scmp.ne.s32.totalorder %s274, %s275
      %p286 = scmp.eq.s32.totalorder %s30, 0
      %p287 = por %p285, %p286
      %p288 = scmp.ne.s32.totalorder %s274, %s275
      %p289 = scmp.eq.s32.totalorder %s31, 1
      %p290 = por %p288, %p289
      %p292 = scmp.ne.s32.totalorder %s275, %s291
      %p293 = scmp.eq.s32.totalorder %s31, 0
      %p294 = por %p292, %p293
      %p295 = scmp.le.s32.totalorder 1, %s25
      %p296 = scmp.lt.s32.totalorder %s25, 3
      %p297 = pnand %p295, %p296
      %p298 = pneg %p297
      // Predicated region
      $region9: #{tpu_custom_call.1} parent=5 // pred_check
        _
      $region10: #{tpu_custom_call.1} parent=5 // pred_check_branch
        %300 = sbr.rel (%p297) target = $region12
      $region11: #{tpu_custom_call.1} parent=5 // pred_region
        %s301 = ssub.s32 %s25, 1
        // Predicated region
        $region13: #{tpu_custom_call.1} parent=11 // pred_check
          %p302 = pneg %p72
        $region14: #{tpu_custom_call.1} parent=11 // pred_check_branch
          %304 = sbr.rel (%p302) target = $region16
        $region15: #{tpu_custom_call.1} parent=11 // pred_region
          %s306 = ssub.s32 256, 256
          %307 = vsyncadd [#allocation6], %s306
          %s308 = sshll.u32 [#allocation5], 4
          %s309 = int_to_ptr.vmem [resolvable:$true] %s308
          %314 = dma.hbm_to_vmem [thread:$0]  %s1, 256, %s309, [#allocation6], 64, 64, 4
        $region16: #{tpu_custom_call.1} parent=11 // pred_fallthru
          _
        // Predicated region
        $region17: #{tpu_custom_call.1} parent=11 // pred_check
          %p315 = pneg %p93
        $region18: #{tpu_custom_call.1} parent=11 // pred_check_branch
          %317 = sbr.rel (%p315) target = $region20
        $region19: #{tpu_custom_call.1} parent=11 // pred_region
          %s319 = ssub.s32 256, 256
          %320 = vsyncadd [#allocation6], %s319
          %s321 = sshll.u32 [#allocation7], 4
          %s322 = int_to_ptr.vmem [resolvable:$true] %s321
          %327 = dma.hbm_to_vmem [thread:$0]  %s2, 256, %s322, [#allocation6], 64, 64, 4
        $region20: #{tpu_custom_call.1} parent=11 // pred_fallthru
          _
        // Predicated region
        $region21: #{tpu_custom_call.1} parent=11 // pred_check
          %p328 = pneg %p114
        $region22: #{tpu_custom_call.1} parent=11 // pred_check_branch
          %330 = sbr.rel (%p328) target = $region24
        $region23: #{tpu_custom_call.1} parent=11 // pred_region
          %s332 = ssub.s32 256, 256
          %333 = vsyncadd [#allocation9], %s332
          %s334 = sshll.u32 [#allocation8], 4
          %s335 = int_to_ptr.vmem [resolvable:$true] %s334
          %340 = dma.hbm_to_vmem [thread:$0]  %s3, 256, %s335, [#allocation9], 64, 64, 4
        $region24: #{tpu_custom_call.1} parent=11 // pred_fallthru
          _
        // Predicated region
        $region25: #{tpu_custom_call.1} parent=11 // pred_check
          %p341 = pneg %p135
        $region26: #{tpu_custom_call.1} parent=11 // pred_check_branch
          %343 = sbr.rel (%p341) target = $region28
        $region27: #{tpu_custom_call.1} parent=11 // pred_region
          %s345 = ssub.s32 256, 256
          %346 = vsyncadd [#allocation9], %s345
          %s347 = sshll.u32 [#allocation10], 4
          %s348 = int_to_ptr.vmem [resolvable:$true] %s347
          %353 = dma.hbm_to_vmem [thread:$0]  %s4, 256, %s348, [#allocation9], 64, 64, 4
        $region28: #{tpu_custom_call.1} parent=11 // pred_fallthru
          _
        // Predicated region
        $region29: #{tpu_custom_call.1} parent=11 // pred_check
          %p354 = pneg %p156
        $region30: #{tpu_custom_call.1} parent=11 // pred_check_branch
          %356 = sbr.rel (%p354) target = $region32
        $region31: #{tpu_custom_call.1} parent=11 // pred_region
          _
        $region32: #{tpu_custom_call.1} parent=11 // pred_fallthru
          _
        // Predicated region
        $region33: #{tpu_custom_call.1} parent=11 // pred_check
          %p357 = pneg %p177
        $region34: #{tpu_custom_call.1} parent=11 // pred_check_branch
          %359 = sbr.rel (%p357) target = $region36
        $region35: #{tpu_custom_call.1} parent=11 // pred_region
          _
        $region36: #{tpu_custom_call.1} parent=11 // pred_fallthru
          _
        // Predicated region
        $region37: #{tpu_custom_call.1} parent=11 // pred_check
          %p360 = pneg %p198
        $region38: #{tpu_custom_call.1} parent=11 // pred_check_branch
          %362 = sbr.rel (%p360) target = $region40
        $region39: #{tpu_custom_call.1} parent=11 // pred_region
          _
        $region40: #{tpu_custom_call.1} parent=11 // pred_fallthru
          _
        // Predicated region
        $region41: #{tpu_custom_call.1} parent=11 // pred_check
          %p363 = pneg %p219
        $region42: #{tpu_custom_call.1} parent=11 // pred_check_branch
          %365 = sbr.rel (%p363) target = $region44
        $region43: #{tpu_custom_call.1} parent=11 // pred_region
          _
        $region44: #{tpu_custom_call.1} parent=11 // pred_fallthru
          _
        // Predicated region
        $region45: #{tpu_custom_call.1} parent=11 // pred_check
          %p366 = pneg %p240
        $region46: #{tpu_custom_call.1} parent=11 // pred_check_branch
          %368 = sbr.rel (%p366) target = $region48
        $region47: #{tpu_custom_call.1} parent=11 // pred_region
          _
        $region48: #{tpu_custom_call.1} parent=11 // pred_fallthru
          _
        // Predicated region
        $region49: #{tpu_custom_call.1} parent=11 // pred_check
          %p369 = pneg %p261
        $region50: #{tpu_custom_call.1} parent=11 // pred_check_branch
          %371 = sbr.rel (%p369) target = $region52
        $region51: #{tpu_custom_call.1} parent=11 // pred_region
          _
        $region52: #{tpu_custom_call.1} parent=11 // pred_fallthru
          _
      $region12: #{tpu_custom_call.1} parent=5 // pred_fallthru
        _
      %p372 = scmp.lt.s32.totalorder %s25, 2
      // Predicated region
      $region53: #{tpu_custom_call.1} parent=5 // pred_check
        %p373 = pneg %p372
      $region54: #{tpu_custom_call.1} parent=5 // pred_check_branch
        %375 = sbr.rel (%p373) target = $region56
      $region55: #{tpu_custom_call.1} parent=5 // pred_region
        // Predicated region
        $region57: #{tpu_custom_call.1} parent=55 // pred_check
          %p376 = pneg %p45
        $region58: #{tpu_custom_call.1} parent=55 // pred_check_branch
          %378 = sbr.rel (%p376) target = $region60
        $region59: #{tpu_custom_call.1} parent=55 // pred_region
          %s379 = sand.u32 %s35, 1
          %s380 = scalar_lea.sflag [#allocation3], %s379
          %s381 = sand.u32 %s35, 1
          %s382 = smul.addr %s381, 8
          %s383 = scalar_lea.vmem [#allocation2], %s382
          %s385 = ssub.s32 128, 128
          %386 = vsyncadd %s380, %s385
          %s387 = smul.addr %s25, 128
          %s388 = scalar_lea.hbm %s0, %s387
          %s390 = sshll.u32 %s383, 4
          %s391 = int_to_ptr.vmem [resolvable:$true] %s390
          %393 = dma.hbm_to_vmem [thread:$0]  %s388, 128, %s391, %s380
        $region60: #{tpu_custom_call.1} parent=55 // pred_fallthru
          _
      $region56: #{tpu_custom_call.1} parent=5 // pred_fallthru
        _
      %p394 = scmp.le.s32.totalorder 1, %s25
      %p395 = scmp.lt.s32.totalorder %s25, 3
      %p396 = pnand %p394, %p395
      %p397 = pneg %p396
      // Predicated region
      $region61: #{tpu_custom_call.1} parent=5 // pred_check
        _
      $region62: #{tpu_custom_call.1} parent=5 // pred_check_branch
        %399 = sbr.rel (%p396) target = $region64
      $region63: #{tpu_custom_call.1} parent=5 // pred_region
        %s400 = ssub.s32 %s25, 1
        %s401 = sand.u32 %s38, 1
        %s402 = scalar_lea.sflag [#allocation3], %s401
        %s403 = sand.u32 %s38, 1
        %s404 = smul.addr %s403, 8
        %s405 = scalar_lea.vmem [#allocation2], %s404
        // Predicated region
        $region65: #{tpu_custom_call.1} parent=63 // pred_check
          %p406 = pneg %p51
        $region66: #{tpu_custom_call.1} parent=63 // pred_check_branch
          %408 = sbr.rel (%p406) target = $region68
        $region67: #{tpu_custom_call.1} parent=63 // pred_region
          %409 = dma.done %s402, 128
        $region68: #{tpu_custom_call.1} parent=63 // pred_fallthru
          _
        // Predicated region
        $region69: #{tpu_custom_call.1} parent=63 // pred_check
          %p410 = pneg %p72
        $region70: #{tpu_custom_call.1} parent=63 // pred_check_branch
          %412 = sbr.rel (%p410) target = $region72
        $region71: #{tpu_custom_call.1} parent=63 // pred_region
          %413 = dma.done [#allocation6], 256
        $region72: #{tpu_custom_call.1} parent=63 // pred_fallthru
          _
        // Predicated region
        $region73: #{tpu_custom_call.1} parent=63 // pred_check
          %p414 = pneg %p93
        $region74: #{tpu_custom_call.1} parent=63 // pred_check_branch
          %416 = sbr.rel (%p414) target = $region76
        $region75: #{tpu_custom_call.1} parent=63 // pred_region
          %417 = dma.done [#allocation6], 256
        $region76: #{tpu_custom_call.1} parent=63 // pred_fallthru
          _
        // Predicated region
        $region77: #{tpu_custom_call.1} parent=63 // pred_check
          %p418 = pneg %p114
        $region78: #{tpu_custom_call.1} parent=63 // pred_check_branch
          %420 = sbr.rel (%p418) target = $region80
        $region79: #{tpu_custom_call.1} parent=63 // pred_region
          %421 = dma.done [#allocation9], 256
        $region80: #{tpu_custom_call.1} parent=63 // pred_fallthru
          _
        // Predicated region
        $region81: #{tpu_custom_call.1} parent=63 // pred_check
          %p422 = pneg %p135
        $region82: #{tpu_custom_call.1} parent=63 // pred_check_branch
          %424 = sbr.rel (%p422) target = $region84
        $region83: #{tpu_custom_call.1} parent=63 // pred_region
          %425 = dma.done [#allocation9], 256
        $region84: #{tpu_custom_call.1} parent=63 // pred_fallthru
          _
        %s426 = sand.u32 %s38, 1
        %s427 = scalar_lea.sflag [#allocation3], %s426
        %s428 = sand.u32 %s38, 1
        %s429 = smul.addr %s428, 8
        %s430 = scalar_lea.vmem [#allocation2], %s429
        %p431 = pneg %p51
        %p432 = pneg %p48
        %p433 = pneg %p72
        %p434 = pneg %p69
        %p435 = pneg %p93
        %p436 = pneg %p90
        %p437 = pneg %p114
        %p438 = pneg %p111
        %p439 = pneg %p135
        %p440 = pneg %p132
        %p441 = pneg %p156
        %p442 = pneg %p153
        %p443 = pneg %p177
        %p444 = pneg %p174
        %p445 = pneg %p198
        %p446 = pneg %p195
        %p447 = pneg %p219
        %p448 = pneg %p216
        %p449 = pneg %p240
        %p450 = pneg %p237
        %p451 = pneg %p261
        %p452 = pneg %p258
        %p453 = pneg %p287
        %p454 = pneg %p284
        %s455 = sand.u32 %s274, 1
        %s456 = scalar_lea.sflag [#allocation4], %s455
        %s457 = sand.u32 %s274, 1
        %s458 = smul.addr %s457, 8
        %s459 = scalar_lea.vmem [#allocation11], %s458
        %v461 = vld [vmem:[%s405] sm:$0xff]
        %v462 = vpack.c.bf16 %v461, %v461
        %v463 = vld [vmem:[#allocation5] sm:$0xf]
        %v464 = vld [vmem:[#allocation5 + $0x4] sm:$0xf]
        %v465 = vld [vmem:[#allocation5 + $0x8] sm:$0xf]
        %v466 = vld [vmem:[#allocation5 + $0xc] sm:$0xf]
        %v467 = vld [vmem:[%s5] sm:$0x1]
        %v469 = vlaneseq
        %v470 = vshrl.u32 %v469, 7
        %v471 = vsub.s32 0, %v470
        %v472 = vrot.slane %v467, %v471
        %v478 = vunpack.c.l.b16 %v463
        %v479 = vunpack.c.l.b16 %v464
        %v480 = vunpack.c.l.b16 %v465
        %v481 = vunpack.c.l.b16 %v466
        %v482 = vpack.c.b16 %v479, %v478
        %v483 = vpack.c.b16 %v481, %v480
        %vm486 = vcmask 261120
        %v488 = vsel %vm486, %v462, 0
        %490 = vmatprep.subr.bf16.mxu0 0
        %491 = vmatpush1.bf16.msra.mxu0 %v482
        %492 = vmatprep.subr.bf16.mxu0 0
        %493 = vmatpush1.bf16.msra.mxu0 %v483
        %494 = vmatprep.subr.bf16.mxu0 0
        %495 = vmatpush1.bf16.msra.mxu0 0
        %496 = vmatprep.subr.bf16.mxu0 0
        %497 = vmatpush1.bf16.msra.mxu0 0
        %498 = vmatprep.subr.bf16.mxu0 0
        %499 = vmatpush1.bf16.msra.mxu0 0
        %500 = vmatprep.subr.bf16.mxu0 0
        %501 = vmatpush1.bf16.msra.mxu0 0
        %502 = vmatprep.subr.bf16.mxu0 0
        %503 = vmatpush1.bf16.msra.mxu0 0
        %504 = vmatprep.subr.bf16.mxu0 0
        %505 = vmatpush1.bf16.msra.mxu0 0
        %506 = vmatprep.subr.bf16.mxu0 0
        %507 = vmatpush1.bf16.msra.mxu0 0
        %508 = vmatprep.subr.bf16.mxu0 0
        %509 = vmatpush1.bf16.msra.mxu0 0
        %510 = vmatprep.subr.bf16.mxu0 0
        %511 = vmatpush1.bf16.msra.mxu0 0
        %512 = vmatprep.subr.bf16.mxu0 0
        %513 = vmatpush1.bf16.msra.mxu0 0
        %514 = vmatprep.subr.bf16.mxu0 0
        %515 = vmatpush1.bf16.msra.mxu0 0
        %516 = vmatprep.subr.bf16.mxu0 0
        %517 = vmatpush1.bf16.msra.mxu0 0
        %518 = vmatprep.subr.bf16.mxu0 0
        %519 = vmatpush1.bf16.msra.mxu0 0
        %520 = vmatprep.subr.bf16.mxu0 0
        %521 = vmatpush1.bf16.msra.mxu0 0
        %522 = vmatprep.mubr.bf16.mxu0 0
        %523 = vmatmul.mubr.bf16.gmra.mrb[0].mxu0 %v488
        %v524 = vpop.f32.mrb[0].mxu0
        %v525 = vadd.f32 %v472, %v524
        %v526 = vpop.f32.mrb[0].mxu0
        %v527 = vpop.f32.mrb[0].mxu0
        %v528 = vpop.f32.mrb[0].mxu0
        %529 = vdwg.mxu0
        %v530 = vld [vmem:[#allocation7] sm:$0xf]
        %v531 = vld [vmem:[#allocation7 + $0x4] sm:$0xf]
        %v532 = vld [vmem:[#allocation7 + $0x8] sm:$0xf]
        %v533 = vld [vmem:[#allocation7 + $0xc] sm:$0xf]
        %v534 = vld [vmem:[%s6] sm:$0x1]
        %v536 = vlaneseq
        %v537 = vshrl.u32 %v536, 7
        %v538 = vsub.s32 0, %v537
        %v539 = vrot.slane %v534, %v538
        %v545 = vunpack.c.l.b16 %v530
        %v546 = vunpack.c.l.b16 %v531
        %v547 = vunpack.c.l.b16 %v532
        %v548 = vunpack.c.l.b16 %v533
        %v549 = vpack.c.b16 %v546, %v545
        %v550 = vpack.c.b16 %v548, %v547
        %553 = vmatprep.subr.bf16.mxu0 0
        %554 = vmatpush1.bf16.msra.mxu0 %v549
        %555 = vmatprep.subr.bf16.mxu0 0
        %556 = vmatpush1.bf16.msra.mxu0 %v550
        %557 = vmatprep.subr.bf16.mxu0 0
        %558 = vmatpush1.bf16.msra.mxu0 0
        %559 = vmatprep.subr.bf16.mxu0 0
        %560 = vmatpush1.bf16.msra.mxu0 0
        %561 = vmatprep.subr.bf16.mxu0 0
        %562 = vmatpush1.bf16.msra.mxu0 0
        %563 = vmatprep.subr.bf16.mxu0 0
        %564 = vmatpush1.bf16.msra.mxu0 0
        %565 = vmatprep.subr.bf16.mxu0 0
        %566 = vmatpush1.bf16.msra.mxu0 0
        %567 = vmatprep.subr.bf16.mxu0 0
        %568 = vmatpush1.bf16.msra.mxu0 0
        %569 = vmatprep.subr.bf16.mxu0 0
        %570 = vmatpush1.bf16.msra.mxu0 0
        %571 = vmatprep.subr.bf16.mxu0 0
        %572 = vmatpush1.bf16.msra.mxu0 0
        %573 = vmatprep.subr.bf16.mxu0 0
        %574 = vmatpush1.bf16.msra.mxu0 0
        %575 = vmatprep.subr.bf16.mxu0 0
        %576 = vmatpush1.bf16.msra.mxu0 0
        %577 = vmatprep.subr.bf16.mxu0 0
        %578 = vmatpush1.bf16.msra.mxu0 0
        %579 = vmatprep.subr.bf16.mxu0 0
        %580 = vmatpush1.bf16.msra.mxu0 0
        %581 = vmatprep.subr.bf16.mxu0 0
        %582 = vmatpush1.bf16.msra.mxu0 0
        %583 = vmatprep.subr.bf16.mxu0 0
        %584 = vmatpush1.bf16.msra.mxu0 0
        %585 = vmatprep.mubr.bf16.mxu0 0
        %586 = vmatmul.mubr.bf16.gmra.mrb[0].mxu0 %v488
        %v587 = vpop.f32.mrb[0].mxu0
        %v588 = vadd.f32 %v539, %v587
        %v589 = vpop.f32.mrb[0].mxu0
        %v590 = vpop.f32.mrb[0].mxu0
        %v591 = vpop.f32.mrb[0].mxu0
        %592 = vdwg.mxu0
        %v593 = vld [vmem:[#allocation8] sm:$0xf]
        %v594 = vld [vmem:[#allocation8 + $0x4] sm:$0xf]
        %v595 = vld [vmem:[#allocation8 + $0x8] sm:$0xf]
        %v596 = vld [vmem:[#allocation8 + $0xc] sm:$0xf]
        %v597 = vld [vmem:[%s7] sm:$0x1]
        %v599 = vlaneseq
        %v600 = vshrl.u32 %v599, 7
        %v601 = vsub.s32 0, %v600
        %v602 = vrot.slane %v597, %v601
        %v608 = vunpack.c.l.b16 %v593
        %v609 = vunpack.c.l.b16 %v594
        %v610 = vunpack.c.l.b16 %v595
        %v611 = vunpack.c.l.b16 %v596
        %v612 = vpack.c.b16 %v609, %v608
        %v613 = vpack.c.b16 %v611, %v610
        %616 = vmatprep.subr.bf16.mxu0 0
        %617 = vmatpush1.bf16.msra.mxu0 %v612
        %618 = vmatprep.subr.bf16.mxu0 0
        %619 = vmatpush1.bf16.msra.mxu0 %v613
        %620 = vmatprep.subr.bf16.mxu0 0
        %621 = vmatpush1.bf16.msra.mxu0 0
        %622 = vmatprep.subr.bf16.mxu0 0
        %623 = vmatpush1.bf16.msra.mxu0 0
        %624 = vmatprep.subr.bf16.mxu0 0
        %625 = vmatpush1.bf16.msra.mxu0 0
        %626 = vmatprep.subr.bf16.mxu0 0
        %627 = vmatpush1.bf16.msra.mxu0 0
        %628 = vmatprep.subr.bf16.mxu0 0
        %629 = vmatpush1.bf16.msra.mxu0 0
        %630 = vmatprep.subr.bf16.mxu0 0
        %631 = vmatpush1.bf16.msra.mxu0 0
        %632 = vmatprep.subr.bf16.mxu0 0
        %633 = vmatpush1.bf16.msra.mxu0 0
        %634 = vmatprep.subr.bf16.mxu0 0
        %635 = vmatpush1.bf16.msra.mxu0 0
        %636 = vmatprep.subr.bf16.mxu0 0
        %637 = vmatpush1.bf16.msra.mxu0 0
        %638 = vmatprep.subr.bf16.mxu0 0
        %639 = vmatpush1.bf16.msra.mxu0 0
        %640 = vmatprep.subr.bf16.mxu0 0
        %641 = vmatpush1.bf16.msra.mxu0 0
        %642 = vmatprep.subr.bf16.mxu0 0
        %643 = vmatpush1.bf16.msra.mxu0 0
        %644 = vmatprep.subr.bf16.mxu0 0
        %645 = vmatpush1.bf16.msra.mxu0 0
        %646 = vmatprep.subr.bf16.mxu0 0
        %647 = vmatpush1.bf16.msra.mxu0 0
        %648 = vmatprep.mubr.bf16.mxu0 0
        %649 = vmatmul.mubr.bf16.gmra.mrb[0].mxu0 %v488
        %v650 = vpop.f32.mrb[0].mxu0
        %v651 = vadd.f32 %v602, %v650
        %v652 = vpop.f32.mrb[0].mxu0
        %v653 = vpop.f32.mrb[0].mxu0
        %v654 = vpop.f32.mrb[0].mxu0
        %655 = vdwg.mxu0
        %v656 = vpack.c.bf16 %v525, %v525
        %v657 = vpack.c.bf16 %v588, %v588
        %v658 = vpack.c.bf16 %v651, %v651
        %vm659 = vcmask 64512
        %v661 = vsel %vm659, %v656, 0
        %v664 = vsel %vm659, %v657, 0
        %666 = vmatprep.subr.bf16.mxu0 0
        %667 = vmatpush1.bf16.xpose.msra.mxu0 %v664
        %668 = vmatprep.subr.bf16.mxu0 0
        %669 = vmatpush1.bf16.xpose.msra.mxu0 0
        %670 = vmatprep.subr.bf16.mxu0 0
        %671 = vmatpush1.bf16.xpose.msra.mxu0 0
        %672 = vmatprep.subr.bf16.mxu0 0
        %673 = vmatpush1.bf16.xpose.msra.mxu0 0
        %674 = vmatprep.subr.bf16.mxu0 0
        %675 = vmatpush1.bf16.xpose.msra.mxu0 0
        %676 = vmatprep.subr.bf16.mxu0 0
        %677 = vmatpush1.bf16.xpose.msra.mxu0 0
        %678 = vmatprep.subr.bf16.mxu0 0
        %679 = vmatpush1.bf16.xpose.msra.mxu0 0
        %680 = vmatprep.subr.bf16.mxu0 0
        %681 = vmatpush1.bf16.xpose.msra.mxu0 0
        %682 = vmatprep.subr.bf16.mxu0 0
        %683 = vmatpush1.bf16.xpose.msra.mxu0 0
        %684 = vmatprep.subr.bf16.mxu0 0
        %685 = vmatpush1.bf16.xpose.msra.mxu0 0
        %686 = vmatprep.subr.bf16.mxu0 0
        %687 = vmatpush1.bf16.xpose.msra.mxu0 0
        %688 = vmatprep.subr.bf16.mxu0 0
        %689 = vmatpush1.bf16.xpose.msra.mxu0 0
        %690 = vmatprep.subr.bf16.mxu0 0
        %691 = vmatpush1.bf16.xpose.msra.mxu0 0
        %692 = vmatprep.subr.bf16.mxu0 0
        %693 = vmatpush1.bf16.xpose.msra.mxu0 0
        %694 = vmatprep.subr.bf16.mxu0 0
        %695 = vmatpush1.bf16.xpose.msra.mxu0 0
        %696 = vmatprep.subr.bf16.mxu0 0
        %697 = vmatpush1.bf16.xpose.msra.mxu0 0
        %698 = vmatprep.mubr.bf16.mxu0 0
        %699 = vmatmul.mubr.bf16.gmra.mrb[0].mxu0 %v661
        %v700 = vpop.f32.mrb[0].mxu0
        %v701 = vadd.f32 0.0, %v700
        %v702 = vpop.f32.mrb[0].mxu0
        %v703 = vpop.f32.mrb[0].mxu0
        %v704 = vpop.f32.mrb[0].mxu0
        %705 = vdwg.mxu0
        %v706 = vsel %vm659, %v701, -inf
        %707 = vmax.xlane.f32.xlu0 %v706
        %v708 = vpop.xlane.xlu0 %707
        %v709 = vsub.f32 %v701, %v708
        %v710 = vmul.f32 %v709, 1.442695
        %v711 = vpow.pop %v710
        %v712 = vsel %vm659, %v711, 0.0
        %713 = vadd.xlane.f32.xlu0 %v712
        %v714 = vpop.xlane.xlu0 %713
        %v715 = vrcp.pop %v714
        %v716 = vmul.f32 %v711, %v715
        %v717 = vpack.c.bf16 %v716, %v716
        %v719 = vsel %vm659, %v717, 0
        %vm721 = vcmask 1043456
        %v723 = vsel %vm721, %v658, 0
        %725 = vmatprep.subr.bf16.mxu0 0
        %726 = vmatpush1.bf16.msra.mxu0 %v723
        %727 = vmatprep.subr.bf16.mxu0 0
        %728 = vmatpush1.bf16.msra.mxu0 0
        %729 = vmatprep.subr.bf16.mxu0 0
        %730 = vmatpush1.bf16.msra.mxu0 0
        %731 = vmatprep.subr.bf16.mxu0 0
        %732 = vmatpush1.bf16.msra.mxu0 0
        %733 = vmatprep.subr.bf16.mxu0 0
        %734 = vmatpush1.bf16.msra.mxu0 0
        %735 = vmatprep.subr.bf16.mxu0 0
        %736 = vmatpush1.bf16.msra.mxu0 0
        %737 = vmatprep.subr.bf16.mxu0 0
        %738 = vmatpush1.bf16.msra.mxu0 0
        %739 = vmatprep.subr.bf16.mxu0 0
        %740 = vmatpush1.bf16.msra.mxu0 0
        %741 = vmatprep.subr.bf16.mxu0 0
        %742 = vmatpush1.bf16.msra.mxu0 0
        %743 = vmatprep.subr.bf16.mxu0 0
        %744 = vmatpush1.bf16.msra.mxu0 0
        %745 = vmatprep.subr.bf16.mxu0 0
        %746 = vmatpush1.bf16.msra.mxu0 0
        %747 = vmatprep.subr.bf16.mxu0 0
        %748 = vmatpush1.bf16.msra.mxu0 0
        %749 = vmatprep.subr.bf16.mxu0 0
        %750 = vmatpush1.bf16.msra.mxu0 0
        %751 = vmatprep.subr.bf16.mxu0 0
        %752 = vmatpush1.bf16.msra.mxu0 0
        %753 = vmatprep.subr.bf16.mxu0 0
        %754 = vmatpush1.bf16.msra.mxu0 0
        %755 = vmatprep.subr.bf16.mxu0 0
        %756 = vmatpush1.bf16.msra.mxu0 0
        %757 = vmatprep.mubr.bf16.mxu0 0
        %758 = vmatmul.mubr.bf16.gmra.mrb[0].mxu0 %v719
        %v759 = vpop.f32.mrb[0].mxu0
        %v760 = vadd.f32 0.0, %v759
        %v761 = vpop.f32.mrb[0].mxu0
        %v762 = vpop.f32.mrb[0].mxu0
        %v763 = vpop.f32.mrb[0].mxu0
        %764 = vdwg.mxu0
        %766 = vrot.lane.b32.xlu0 %v656, 120
        %v767 = vpop.permute.xlu0 %766
        %769 = vrot.lane.b32.xlu0 %v657, 120
        %v770 = vpop.permute.xlu0 %769
        %v772 = vsel %vm659, %v767, 0
        %v775 = vsel %vm659, %v770, 0
        %777 = vmatprep.subr.bf16.mxu0 0
        %778 = vmatpush1.bf16.xpose.msra.mxu0 %v775
        %779 = vmatprep.subr.bf16.mxu0 0
        %780 = vmatpush1.bf16.xpose.msra.mxu0 0
        %781 = vmatprep.subr.bf16.mxu0 0
        %782 = vmatpush1.bf16.xpose.msra.mxu0 0
        %783 = vmatprep.subr.bf16.mxu0 0
        %784 = vmatpush1.bf16.xpose.msra.mxu0 0
        %785 = vmatprep.subr.bf16.mxu0 0
        %786 = vmatpush1.bf16.xpose.msra.mxu0 0
        %787 = vmatprep.subr.bf16.mxu0 0
        %788 = vmatpush1.bf16.xpose.msra.mxu0 0
        %789 = vmatprep.subr.bf16.mxu0 0
        %790 = vmatpush1.bf16.xpose.msra.mxu0 0
        %791 = vmatprep.subr.bf16.mxu0 0
        %792 = vmatpush1.bf16.xpose.msra.mxu0 0
        %793 = vmatprep.subr.bf16.mxu0 0
        %794 = vmatpush1.bf16.xpose.msra.mxu0 0
        %795 = vmatprep.subr.bf16.mxu0 0
        %796 = vmatpush1.bf16.xpose.msra.mxu0 0
        %797 = vmatprep.subr.bf16.mxu0 0
        %798 = vmatpush1.bf16.xpose.msra.mxu0 0
        %799 = vmatprep.subr.bf16.mxu0 0
        %800 = vmatpush1.bf16.xpose.msra.mxu0 0
        %801 = vmatprep.subr.bf16.mxu0 0
        %802 = vmatpush1.bf16.xpose.msra.mxu0 0
        %803 = vmatprep.subr.bf16.mxu0 0
        %804 = vmatpush1.bf16.xpose.msra.mxu0 0
        %805 = vmatprep.subr.bf16.mxu0 0
        %806 = vmatpush1.bf16.xpose.msra.mxu0 0
        %807 = vmatprep.subr.bf16.mxu0 0
        %808 = vmatpush1.bf16.xpose.msra.mxu0 0
        %809 = vmatprep.mubr.bf16.mxu0 0
        %810 = vmatmul.mubr.bf16.gmra.mrb[0].mxu0 %v772
        %v811 = vpop.f32.mrb[0].mxu0
        %v812 = vadd.f32 0.0, %v811
        %v813 = vpop.f32.mrb[0].mxu0
        %v814 = vpop.f32.mrb[0].mxu0
        %v815 = vpop.f32.mrb[0].mxu0
        %816 = vdwg.mxu0
        %v817 = vsel %vm659, %v812, -inf
        %818 = vmax.xlane.f32.xlu0 %v817
        %v819 = vpop.xlane.xlu0 %818
        %v820 = vsub.f32 %v812, %v819
        %v821 = vmul.f32 %v820, 1.442695
        %v822 = vpow.pop %v821
        %v823 = vsel %vm659, %v822, 0.0
        %824 = vadd.xlane.f32.xlu0 %v823
        %v825 = vpop.xlane.xlu0 %824
        %v826 = vrcp.pop %v825
        %v827 = vmul.f32 %v822, %v826
        %v828 = vpack.c.bf16 %v827, %v827
        %830 = vrot.lane.b32.xlu0 %v658, 120
        %v831 = vpop.permute.xlu0 %830
        %v833 = vsel %vm659, %v828, 0
        %v836 = vsel %vm721, %v831, 0
        %838 = vmatprep.subr.bf16.mxu0 0
        %839 = vmatpush1.bf16.msra.mxu0 %v836
        %840 = vmatprep.subr.bf16.mxu0 0
        %841 = vmatpush1.bf16.msra.mxu0 0
        %842 = vmatprep.subr.bf16.mxu0 0
        %843 = vmatpush1.bf16.msra.mxu0 0
        %844 = vmatprep.subr.bf16.mxu0 0
        %845 = vmatpush1.bf16.msra.mxu0 0
        %846 = vmatprep.subr.bf16.mxu0 0
        %847 = vmatpush1.bf16.msra.mxu0 0
        %848 = vmatprep.subr.bf16.mxu0 0
        %849 = vmatpush1.bf16.msra.mxu0 0
        %850 = vmatprep.subr.bf16.mxu0 0
        %851 = vmatpush1.bf16.msra.mxu0 0
        %852 = vmatprep.subr.bf16.mxu0 0
        %853 = vmatpush1.bf16.msra.mxu0 0
        %854 = vmatprep.subr.bf16.mxu0 0
        %855 = vmatpush1.bf16.msra.mxu0 0
        %856 = vmatprep.subr.bf16.mxu0 0
        %857 = vmatpush1.bf16.msra.mxu0 0
        %858 = vmatprep.subr.bf16.mxu0 0
        %859 = vmatpush1.bf16.msra.mxu0 0
        %860 = vmatprep.subr.bf16.mxu0 0
        %861 = vmatpush1.bf16.msra.mxu0 0
        %862 = vmatprep.subr.bf16.mxu0 0
        %863 = vmatpush1.bf16.msra.mxu0 0
        %864 = vmatprep.subr.bf16.mxu0 0
        %865 = vmatpush1.bf16.msra.mxu0 0
        %866 = vmatprep.subr.bf16.mxu0 0
        %867 = vmatpush1.bf16.msra.mxu0 0
        %868 = vmatprep.subr.bf16.mxu0 0
        %869 = vmatpush1.bf16.msra.mxu0 0
        %870 = vmatprep.mubr.bf16.mxu0 0
        %871 = vmatmul.mubr.bf16.gmra.mrb[0].mxu0 %v833
        %v872 = vpop.f32.mrb[0].mxu0
        %v873 = vadd.f32 0.0, %v872
        %v874 = vpop.f32.mrb[0].mxu0
        %v875 = vpop.f32.mrb[0].mxu0
        %v876 = vpop.f32.mrb[0].mxu0
        %877 = vdwg.mxu0
        %878 = vrot.lane.b32.xlu0 %v656, 112
        %v879 = vpop.permute.xlu0 %878
        %880 = vrot.lane.b32.xlu0 %v657, 112
        %v881 = vpop.permute.xlu0 %880
        %v883 = vsel %vm659, %v879, 0
        %v886 = vsel %vm659, %v881, 0
        %888 = vmatprep.subr.bf16.mxu0 0
        %889 = vmatpush1.bf16.xpose.msra.mxu0 %v886
        %890 = vmatprep.subr.bf16.mxu0 0
        %891 = vmatpush1.bf16.xpose.msra.mxu0 0
        %892 = vmatprep.subr.bf16.mxu0 0
        %893 = vmatpush1.bf16.xpose.msra.mxu0 0
        %894 = vmatprep.subr.bf16.mxu0 0
        %895 = vmatpush1.bf16.xpose.msra.mxu0 0
        %896 = vmatprep.subr.bf16.mxu0 0
        %897 = vmatpush1.bf16.xpose.msra.mxu0 0
        %898 = vmatprep.subr.bf16.mxu0 0
        %899 = vmatpush1.bf16.xpose.msra.mxu0 0
        %900 = vmatprep.subr.bf16.mxu0 0
        %901 = vmatpush1.bf16.xpose.msra.mxu0 0
        %902 = vmatprep.subr.bf16.mxu0 0
        %903 = vmatpush1.bf16.xpose.msra.mxu0 0
        %904 = vmatprep.subr.bf16.mxu0 0
        %905 = vmatpush1.bf16.xpose.msra.mxu0 0
        %906 = vmatprep.subr.bf16.mxu0 0
        %907 = vmatpush1.bf16.xpose.msra.mxu0 0
        %908 = vmatprep.subr.bf16.mxu0 0
        %909 = vmatpush1.bf16.xpose.msra.mxu0 0
        %910 = vmatprep.subr.bf16.mxu0 0
        %911 = vmatpush1.bf16.xpose.msra.mxu0 0
        %912 = vmatprep.subr.bf16.mxu0 0
        %913 = vmatpush1.bf16.xpose.msra.mxu0 0
        %914 = vmatprep.subr.bf16.mxu0 0
        %915 = vmatpush1.bf16.xpose.msra.mxu0 0
        %916 = vmatprep.subr.bf16.mxu0 0
        %917 = vmatpush1.bf16.xpose.msra.mxu0 0
        %918 = vmatprep.subr.bf16.mxu0 0
        %919 = vmatpush1.bf16.xpose.msra.mxu0 0
        %920 = vmatprep.mubr.bf16.mxu0 0
        %921 = vmatmul.mubr.bf16.gmra.mrb[0].mxu0 %v883
        %v922 = vpop.f32.mrb[0].mxu0
        %v923 = vadd.f32 0.0, %v922
        %v924 = vpop.f32.mrb[0].mxu0
        %v925 = vpop.f32.mrb[0].mxu0
        %v926 = vpop.f32.mrb[0].mxu0
        %927 = vdwg.mxu0
        %v928 = vsel %vm659, %v923, -inf
        %929 = vmax.xlane.f32.xlu0 %v928
        %v930 = vpop.xlane.xlu0 %929
        %v931 = vsub.f32 %v923, %v930
        %v932 = vmul.f32 %v931, 1.442695
        %v933 = vpow.pop %v932
        %v934 = vsel %vm659, %v933, 0.0
        %935 = vadd.xlane.f32.xlu0 %v934
        %v936 = vpop.xlane.xlu0 %935
        %v937 = vrcp.pop %v936
        %v938 = vmul.f32 %v933, %v937
        %v939 = vpack.c.bf16 %v938, %v938
        %940 = vrot.lane.b32.xlu0 %v658, 112
        %v941 = vpop.permute.xlu0 %940
        %v943 = vsel %vm659, %v939, 0
        %v946 = vsel %vm721, %v941, 0
        %948 = vmatprep.subr.bf16.mxu0 0
        %949 = vmatpush1.bf16.msra.mxu0 %v946
        %950 = vmatprep.subr.bf16.mxu0 0
        %951 = vmatpush1.bf16.msra.mxu0 0
        %952 = vmatprep.subr.bf16.mxu0 0
        %953 = vmatpush1.bf16.msra.mxu0 0
        %954 = vmatprep.subr.bf16.mxu0 0
        %955 = vmatpush1.bf16.msra.mxu0 0
        %956 = vmatprep.subr.bf16.mxu0 0
        %957 = vmatpush1.bf16.msra.mxu0 0
        %958 = vmatprep.subr.bf16.mxu0 0
        %959 = vmatpush1.bf16.msra.mxu0 0
        %960 = vmatprep.subr.bf16.mxu0 0
        %961 = vmatpush1.bf16.msra.mxu0 0
        %962 = vmatprep.subr.bf16.mxu0 0
        %963 = vmatpush1.bf16.msra.mxu0 0
        %964 = vmatprep.subr.bf16.mxu0 0
        %965 = vmatpush1.bf16.msra.mxu0 0
        %966 = vmatprep.subr.bf16.mxu0 0
        %967 = vmatpush1.bf16.msra.mxu0 0
        %968 = vmatprep.subr.bf16.mxu0 0
        %969 = vmatpush1.bf16.msra.mxu0 0
        %970 = vmatprep.subr.bf16.mxu0 0
        %971 = vmatpush1.bf16.msra.mxu0 0
        %972 = vmatprep.subr.bf16.mxu0 0
        %973 = vmatpush1.bf16.msra.mxu0 0
        %974 = vmatprep.subr.bf16.mxu0 0
        %975 = vmatpush1.bf16.msra.mxu0 0
        %976 = vmatprep.subr.bf16.mxu0 0
        %977 = vmatpush1.bf16.msra.mxu0 0
        %978 = vmatprep.subr.bf16.mxu0 0
        %979 = vmatpush1.bf16.msra.mxu0 0
        %980 = vmatprep.mubr.bf16.mxu0 0
        %981 = vmatmul.mubr.bf16.gmra.mrb[0].mxu0 %v943
        %v982 = vpop.f32.mrb[0].mxu0
        %v983 = vadd.f32 0.0, %v982
        %v984 = vpop.f32.mrb[0].mxu0
        %v985 = vpop.f32.mrb[0].mxu0
        %v986 = vpop.f32.mrb[0].mxu0
        %987 = vdwg.mxu0
        %988 = vrot.lane.b32.xlu0 %v656, 104
        %v989 = vpop.permute.xlu0 %988
        %990 = vrot.lane.b32.xlu0 %v657, 104
        %v991 = vpop.permute.xlu0 %990
        %v993 = vsel %vm659, %v989, 0
        %v996 = vsel %vm659, %v991, 0
        %998 = vmatprep.subr.bf16.mxu0 0
        %999 = vmatpush1.bf16.xpose.msra.mxu0 %v996
        %1000 = vmatprep.subr.bf16.mxu0 0
        %1001 = vmatpush1.bf16.xpose.msra.mxu0 0
        %1002 = vmatprep.subr.bf16.mxu0 0
        %1003 = vmatpush1.bf16.xpose.msra.mxu0 0
        %1004 = vmatprep.subr.bf16.mxu0 0
        %1005 = vmatpush1.bf16.xpose.msra.mxu0 0
        %1006 = vmatprep.subr.bf16.mxu0 0
        %1007 = vmatpush1.bf16.xpose.msra.mxu0 0
        %1008 = vmatprep.subr.bf16.mxu0 0
        %1009 = vmatpush1.bf16.xpose.msra.mxu0 0
        %1010 = vmatprep.subr.bf16.mxu0 0
        %1011 = vmatpush1.bf16.xpose.msra.mxu0 0
        %1012 = vmatprep.subr.bf16.mxu0 0
        %1013 = vmatpush1.bf16.xpose.msra.mxu0 0
        %1014 = vmatprep.subr.bf16.mxu0 0
        %1015 = vmatpush1.bf16.xpose.msra.mxu0 0
        %1016 = vmatprep.subr.bf16.mxu0 0
        %1017 = vmatpush1.bf16.xpose.msra.mxu0 0
        %1018 = vmatprep.subr.bf16.mxu0 0
        %1019 = vmatpush1.bf16.xpose.msra.mxu0 0
        %1020 = vmatprep.subr.bf16.mxu0 0
        %1021 = vmatpush1.bf16.xpose.msra.mxu0 0
        %1022 = vmatprep.subr.bf16.mxu0 0
        %1023 = vmatpush1.bf16.xpose.msra.mxu0 0
        %1024 = vmatprep.subr.bf16.mxu0 0
        %1025 = vmatpush1.bf16.xpose.msra.mxu0 0
        %1026 = vmatprep.subr.bf16.mxu0 0
        %1027 = vmatpush1.bf16.xpose.msra.mxu0 0
        %1028 = vmatprep.subr.bf16.mxu0 0
        %1029 = vmatpush1.bf16.xpose.msra.mxu0 0
        %1030 = vmatprep.mubr.bf16.mxu0 0
        %1031 = vmatmul.mubr.bf16.gmra.mrb[0].mxu0 %v993
        %v1032 = vpop.f32.mrb[0].mxu0
        %v1033 = vadd.f32 0.0, %v1032
        %v1034 = vpop.f32.mrb[0].mxu0
        %v1035 = vpop.f32.mrb[0].mxu0
        %v1036 = vpop.f32.mrb[0].mxu0
        %1037 = vdwg.mxu0
        %v1038 = vsel %vm659, %v1033, -inf
        %1039 = vmax.xlane.f32.xlu0 %v1038
        %v1040 = vpop.xlane.xlu0 %1039
        %v1041 = vsub.f32 %v1033, %v1040
        %v1042 = vmul.f32 %v1041, 1.442695
        %v1043 = vpow.pop %v1042
        %v1044 = vsel %vm659, %v1043, 0.0
        %1045 = vadd.xlane.f32.xlu0 %v1044
        %v1046 = vpop.xlane.xlu0 %1045
        %v1047 = vrcp.pop %v1046
        %v1048 = vmul.f32 %v1043, %v1047
        %v1049 = vpack.c.bf16 %v1048, %v1048
        %1050 = vrot.lane.b32.xlu0 %v658, 104
        %v1051 = vpop.permute.xlu0 %1050
        %v1053 = vsel %vm659, %v1049, 0
        %v1056 = vsel %vm721, %v1051, 0
        %1058 = vmatprep.subr.bf16.mxu0 0
        %1059 = vmatpush1.bf16.msra.mxu0 %v1056
        %1060 = vmatprep.subr.bf16.mxu0 0
        %1061 = vmatpush1.bf16.msra.mxu0 0
        %1062 = vmatprep.subr.bf16.mxu0 0
        %1063 = vmatpush1.bf16.msra.mxu0 0
        %1064 = vmatprep.subr.bf16.mxu0 0
        %1065 = vmatpush1.bf16.msra.mxu0 0
        %1066 = vmatprep.subr.bf16.mxu0 0
        %1067 = vmatpush1.bf16.msra.mxu0 0
        %1068 = vmatprep.subr.bf16.mxu0 0
        %1069 = vmatpush1.bf16.msra.mxu0 0
        %1070 = vmatprep.subr.bf16.mxu0 0
        %1071 = vmatpush1.bf16.msra.mxu0 0
        %1072 = vmatprep.subr.bf16.mxu0 0
        %1073 = vmatpush1.bf16.msra.mxu0 0
        %1074 = vmatprep.subr.bf16.mxu0 0
        %1075 = vmatpush1.bf16.msra.mxu0 0
        %1076 = vmatprep.subr.bf16.mxu0 0
        %1077 = vmatpush1.bf16.msra.mxu0 0
        %1078 = vmatprep.subr.bf16.mxu0 0
        %1079 = vmatpush1.bf16.msra.mxu0 0
        %1080 = vmatprep.subr.bf16.mxu0 0
        %1081 = vmatpush1.bf16.msra.mxu0 0
        %1082 = vmatprep.subr.bf16.mxu0 0
        %1083 = vmatpush1.bf16.msra.mxu0 0
        %1084 = vmatprep.subr.bf16.mxu0 0
        %1085 = vmatpush1.bf16.msra.mxu0 0
        %1086 = vmatprep.subr.bf16.mxu0 0
        %1087 = vmatpush1.bf16.msra.mxu0 0
        %1088 = vmatprep.subr.bf16.mxu0 0
        %1089 = vmatpush1.bf16.msra.mxu0 0
        %1090 = vmatprep.mubr.bf16.mxu0 0
        %1091 = vmatmul.mubr.bf16.gmra.mrb[0].mxu0 %v1053
        %v1092 = vpop.f32.mrb[0].mxu0
        %v1093 = vadd.f32 0.0, %v1092
        %v1094 = vpop.f32.mrb[0].mxu0
        %v1095 = vpop.f32.mrb[0].mxu0
        %v1096 = vpop.f32.mrb[0].mxu0
        %1097 = vdwg.mxu0
        %1099 = vrot.lane.b32.xlu0 %v873, 8
        %v1100 = vpop.permute.xlu0 %1099
        %1103 = vrot.lane.b32.xlu0 %v983, 16
        %v1104 = vpop.permute.xlu0 %1103
        %1107 = vrot.lane.b32.xlu0 %v1093, 24
        %v1108 = vpop.permute.xlu0 %1107
        %v1110 = vsel %vm659, %v760, %v1100
        %vm1111 = vcmask 130048
        %v1112 = vsel %vm1111, %v1110, %v1104
        %vm1113 = vcmask 195584
        %v1114 = vsel %vm1113, %v1112, %v1108
        %v1115 = vpack.c.bf16 %v1114, %v1114
        %v1116 = vld [vmem:[#allocation10] sm:$0xf]
        %v1117 = vld [vmem:[#allocation10 + $0x4] sm:$0xf]
        %v1118 = vld [vmem:[#allocation10 + $0x8] sm:$0xf]
        %v1119 = vld [vmem:[#allocation10 + $0xc] sm:$0xf]
        %v1120 = vld [vmem:[%s8] sm:$0x1]
        %v1122 = vlaneseq
        %v1123 = vshrl.u32 %v1122, 7
        %v1124 = vsub.s32 0, %v1123
        %v1125 = vrot.slane %v1120, %v1124
        %v1131 = vunpack.c.l.b16 %v1116
        %v1132 = vunpack.c.l.b16 %v1117
        %v1133 = vunpack.c.l.b16 %v1118
        %v1134 = vunpack.c.l.b16 %v1119
        %v1135 = vpack.c.b16 %v1132, %v1131
        %v1136 = vpack.c.b16 %v1134, %v1133
        %v1140 = vsel %vm486, %v1115, 0
        %1142 = vmatprep.subr.bf16.mxu0 0
        %1143 = vmatpush1.bf16.msra.mxu0 %v1135
        %1144 = vmatprep.subr.bf16.mxu0 0
        %1145 = vmatpush1.bf16.msra.mxu0 %v1136
        %1146 = vmatprep.subr.bf16.mxu0 0
        %1147 = vmatpush1.bf16.msra.mxu0 0
        %1148 = vmatprep.subr.bf16.mxu0 0
        %1149 = vmatpush1.bf16.msra.mxu0 0
        %1150 = vmatprep.subr.bf16.mxu0 0
        %1151 = vmatpush1.bf16.msra.mxu0 0
        %1152 = vmatprep.subr.bf16.mxu0 0
        %1153 = vmatpush1.bf16.msra.mxu0 0
        %1154 = vmatprep.subr.bf16.mxu0 0
        %1155 = vmatpush1.bf16.msra.mxu0 0
        %1156 = vmatprep.subr.bf16.mxu0 0
        %1157 = vmatpush1.bf16.msra.mxu0 0
        %1158 = vmatprep.subr.bf16.mxu0 0
        %1159 = vmatpush1.bf16.msra.mxu0 0
        %1160 = vmatprep.subr.bf16.mxu0 0
        %1161 = vmatpush1.bf16.msra.mxu0 0
        %1162 = vmatprep.subr.bf16.mxu0 0
        %1163 = vmatpush1.bf16.msra.mxu0 0
        %1164 = vmatprep.subr.bf16.mxu0 0
        %1165 = vmatpush1.bf16.msra.mxu0 0
        %1166 = vmatprep.subr.bf16.mxu0 0
        %1167 = vmatpush1.bf16.msra.mxu0 0
        %1168 = vmatprep.subr.bf16.mxu0 0
        %1169 = vmatpush1.bf16.msra.mxu0 0
        %1170 = vmatprep.subr.bf16.mxu0 0
        %1171 = vmatpush1.bf16.msra.mxu0 0
        %1172 = vmatprep.subr.bf16.mxu0 0
        %1173 = vmatpush1.bf16.msra.mxu0 0
        %1174 = vmatprep.mubr.bf16.mxu0 0
        %1175 = vmatmul.mubr.bf16.gmra.mrb[0].mxu0 %v1140
        %v1176 = vpop.f32.mrb[0].mxu0
        %v1177 = vadd.f32 %v1125, %v1176
        %v1178 = vpop.f32.mrb[0].mxu0
        %v1179 = vpop.f32.mrb[0].mxu0
        %v1180 = vpop.f32.mrb[0].mxu0
        %1181 = vdwg.mxu0
        %v1182 = vadd.f32 %v461, %v1177
        %v1183 = vsel %vm486, %v1182, 0.0
        %1184 = vadd.xlane.f32.xlu0 %v1183
        %v1185 = vpop.xlane.xlu0 %1184
        %v1186 = vrcp.pop 32.0
        %v1187 = vmul.f32 %v1185, %v1186
        %v1188 = vsub.f32 %v1182, %v1187
        %v1189 = vmul.f32 %v1188, %v1188
        %v1190 = vsel %vm486, %v1189, 0.0
        %1191 = vadd.xlane.f32.xlu0 %v1190
        %v1192 = vpop.xlane.xlu0 %1191
        %v1193 = vmul.f32 %v1192, %v1186
        %v1194 = vadd.f32 %v1193, 1e-05
        %v1195 = vrsqrt.pop %v1194
        %v1196 = vmul.f32 %v1188, %v1195
        %v1197 = vld [vmem:[%s9] sm:$0x1]
        %v1199 = vlaneseq
        %v1200 = vshrl.u32 %v1199, 7
        %v1201 = vsub.s32 0, %v1200
        %v1202 = vrot.slane %v1197, %v1201
        %v1204 = vmul.f32 %v1196, %v1202
        %v1205 = vld [vmem:[%s10] sm:$0x1]
        %v1207 = vlaneseq
        %v1208 = vshrl.u32 %v1207, 7
        %v1209 = vsub.s32 0, %v1208
        %v1210 = vrot.slane %v1205, %v1209
        %v1212 = vadd.f32 %v1204, %v1210
        %1213 = vst.msk [vmem:[%s459] sm:$0xff] %vm486, %v1212
        %s1214 = sand.u32 %s274, 1
        %s1215 = scalar_lea.sflag [#allocation4], %s1214
        %s1216 = sand.u32 %s274, 1
        %s1217 = smul.addr %s1216, 8
        %s1218 = scalar_lea.vmem [#allocation11], %s1217
        // Predicated region
        $region85: #{tpu_custom_call.1} parent=63 // pred_check
          %p1219 = pneg %p284
        $region86: #{tpu_custom_call.1} parent=63 // pred_check_branch
          %1221 = sbr.rel (%p1219) target = $region88
        $region87: #{tpu_custom_call.1} parent=63 // pred_region
          %s1223 = ssub.s32 128, 128
          %1224 = vsyncadd %s1215, %s1223
          %s1225 = smul.addr %s30, 128
          %s1226 = scalar_lea.hbm %s11, %s1225
          %s1228 = sshll.u32 %s1218, 4
          %s1229 = int_to_ptr.vmem [resolvable:$true] %s1228
          %1231 = dma.vmem_to_hbm [thread:$0]  %s1229, 128, %s1226, %s1215
        $region88: #{tpu_custom_call.1} parent=63 // pred_fallthru
          _
      $region64: #{tpu_custom_call.1} parent=5 // pred_fallthru
        _
      %p1232 = scmp.le.s32.totalorder 2, %s25
      // Predicated region
      $region89: #{tpu_custom_call.1} parent=5 // pred_check
        %p1233 = pneg %p1232
      $region90: #{tpu_custom_call.1} parent=5 // pred_check_branch
        %1235 = sbr.rel (%p1233) target = $region92
      $region91: #{tpu_custom_call.1} parent=5 // pred_region
        %s1236 = ssub.s32 %s25, 2
        // Predicated region
        $region93: #{tpu_custom_call.1} parent=91 // pred_check
          %p1237 = pneg %p290
        $region94: #{tpu_custom_call.1} parent=91 // pred_check_branch
          %1239 = sbr.rel (%p1237) target = $region96
        $region95: #{tpu_custom_call.1} parent=91 // pred_region
          %s1240 = sand.u32 %s275, 1
          %s1241 = scalar_lea.sflag [#allocation4], %s1240
          %s1242 = sand.u32 %s275, 1
          %s1243 = smul.addr %s1242, 8
          %s1244 = scalar_lea.vmem [#allocation11], %s1243
          %1245 = dma.done %s1241, 128
        $region96: #{tpu_custom_call.1} parent=91 // pred_fallthru
          _
      $region92: #{tpu_custom_call.1} parent=5 // pred_fallthru
        _
    $region6: #{tpu_custom_call.1} parent=1 // loop_footer
      %s29 = sadd.s32 1, %s25
    $region7: #{tpu_custom_call.1} parent=1 // loop_footer_branch
      %24 = sbr.rel target = $region3
    $region8: #{tpu_custom_call.1} parent=1 // loop_exit
      _
    %1246 = vsyncpa [#allocation3], 1
    %s1247 = scalar_lea.sflag [#allocation3], 1
    %1248 = vsyncpa %s1247, 1
    %1249 = vsyncpa [#allocation6], 1
    %1250 = vsyncpa [#allocation9], 1
    %1251 = vsyncpa [#allocation4], 1
    %s1252 = scalar_lea.sflag [#allocation4], 1
    %1253 = vsyncpa %s1252, 1

</llo_original>
